<compile_context>
chip_gen: v6e
topology: v6e:2x2x1
jax: 0.10.0
libtpu: 0.0.40
codegen_flags: <defaults>
</compile_context>

<pallas_src>
import jax
import jax.numpy as jnp
from jax.experimental import pallas as pl
from jax.experimental.pallas import tpu as pltpu

IN_DIM = 512
HID_DIM = 1024
OUT_DIM = 10
OUT_PAD = 128          # pad the 10-wide output to a lane-dense 128 slab
BN_EPS = 1e-5
TM_DEFAULT = 2048      # batch tile (rows); ~12 MiB total VMEM incl. double-buffers


def _round_up(n, m):
    return ((n + m - 1) // m) * m


def classifier_kernel(x_ref, w1_ref, b1_ref, w2_ref, b2_ref, o_ref):
    # --- Linear(512 -> 1024) with BN scale/shift + bias folded into W1'/b1' ---
    xb = x_ref[...].astype(jnp.bfloat16)
    h = jnp.dot(xb, w1_ref[...], preferred_element_type=jnp.float32)
    # --- + folded bias, ReLU (Dropout(0.3) is identity in eval mode) ---
    h = jnp.maximum(h + b1_ref[...], 0.0)
    # --- Linear(1024 -> 10), output padded to 128 lanes, stored as bf16 ---
    out = jnp.dot(h.astype(jnp.bfloat16), w2_ref[...],
                  preferred_element_type=jnp.float32) + b2_ref[...]
    o_ref[...] = out.astype(o_ref.dtype)


def classifier_forward(x, params, tm=TM_DEFAULT):
    w1, b1, w2p, b2p = params
    B = x.shape[0]

    # Sublane-aligned batch tile; NO wrapper-side padding copy of x — the grid
    # over-covers B and Pallas masks the ragged last block.
    TM = min(tm, _round_up(B, 8))
    grid = (pl.cdiv(B, TM),)

    flops = 2 * B * (IN_DIM * HID_DIM + HID_DIM * OUT_PAD)
    bytes_accessed = (
        w1.size * w1.dtype.itemsize + w2p.size * w2p.dtype.itemsize
        + b1.size * 4 + b2p.size * 4
        + B * IN_DIM * x.dtype.itemsize            # x read
        + B * OUT_PAD * 2)                         # bf16 padded output write

    out_padded = pl.pallas_call(
        classifier_kernel,
        out_shape=jax.ShapeDtypeStruct((B, OUT_PAD), jnp.bfloat16),
        grid=grid,
        in_specs=[
            pl.BlockSpec((TM, IN_DIM), lambda i: (i, 0)),        # x: tiled over batch
            pl.BlockSpec((IN_DIM, HID_DIM), lambda i: (0, 0)),   # W1' (bf16), resident
            pl.BlockSpec((1, HID_DIM), lambda i: (0, 0)),        # b1' (f32),  resident
            pl.BlockSpec((HID_DIM, OUT_PAD), lambda i: (0, 0)),  # W2  (bf16), resident
            pl.BlockSpec((1, OUT_PAD), lambda i: (0, 0)),        # b2  (f32),  resident
        ],
        out_specs=pl.BlockSpec((TM, OUT_PAD), lambda i: (i, 0)),
        compiler_params=pltpu.CompilerParams(
            dimension_semantics=("parallel",),
            vmem_limit_bytes=32 * 1024 * 1024),
        cost_estimate=pl.CostEstimate(
            flops=flops, transcendentals=0, bytes_accessed=bytes_accessed),
    )(x, w1, b1, w2p, b2p)

    # Slice the 10 real logits; tiny cast back to f32 to match module output dtype.
    return out_padded[:, :OUT_DIM].astype(jnp.float32)


def make_params(key):
    """Deterministic parameter init mirroring the module's __init__,
    with eval-mode BatchNorm folded into the first Linear."""
    k1, k2, k3, k4 = jax.random.split(key, 4)

    # Linear 1: kaiming_normal_(mode='fan_out', nonlinearity='relu')
    # PyTorch weight shape [out, in]; fan_out = out_features; std = sqrt(2/fan_out)
    std1 = (2.0 / HID_DIM) ** 0.5
    w1_pt = jax.random.normal(k1, (HID_DIM, IN_DIM), jnp.float32) * std1
    w1 = w1_pt.T                                            # [in, out] for x @ W
    bound1 = 1.0 / (IN_DIM ** 0.5)                          # default bias init
    b1 = jax.random.uniform(k2, (1, HID_DIM), jnp.float32, -bound1, bound1)

    # BatchNorm1d(1024) eval: gamma=1, beta=0, running_mean=0, running_var=1
    gamma = jnp.ones((HID_DIM,), jnp.float32)
    beta = jnp.zeros((HID_DIM,), jnp.float32)
    run_mean = jnp.zeros((HID_DIM,), jnp.float32)
    run_var = jnp.ones((HID_DIM,), jnp.float32)
    inv_std = 1.0 / jnp.sqrt(run_var + BN_EPS)
    scale = gamma * inv_std                                 # [1024]
    shift = beta - run_mean * gamma * inv_std               # [1024]

    # Fold BN into Linear 1:  y = (x@W1 + b1)*scale + shift = x@(W1*scale) + (b1*scale + shift)
    w1_folded = w1 * scale[None, :]
    b1_folded = b1 * scale[None, :] + shift[None, :]

    # Linear 2: kaiming_normal_(mode='fan_out'); fan_out = 10
    std2 = (2.0 / OUT_DIM) ** 0.5
    w2_pt = jax.random.normal(k3, (OUT_DIM, HID_DIM), jnp.float32) * std2
    w2 = w2_pt.T                                            # [1024, 10]
    bound2 = 1.0 / (HID_DIM ** 0.5)
    b2 = jax.random.uniform(k4, (OUT_DIM,), jnp.float32, -bound2, bound2)

    # Pad the narrow output projection to 128 lanes (zeros -> sliced away later)
    w2p = jnp.zeros((HID_DIM, OUT_PAD), jnp.float32).at[:, :OUT_DIM].set(w2)
    b2p = jnp.zeros((1, OUT_PAD), jnp.float32).at[0, :OUT_DIM].set(b2)

    # Weights in bf16 (halves dominant HBM traffic; MXU-native); biases stay f32.
    return (w1_folded.astype(jnp.bfloat16),
            b1_folded.astype(jnp.float32),
            w2p.astype(jnp.bfloat16),
            b2p.astype(jnp.float32))


def reference_forward(x, params):
    """Pure-JAX reference using the exact same (bf16) parameters and dtypes."""
    w1, b1, w2p, b2p = params
    h = jnp.dot(x.astype(jnp.bfloat16), w1,
                preferred_element_type=jnp.float32) + b1
    h = jnp.maximum(h, 0.0)
    out = jnp.dot(h.astype(jnp.bfloat16), w2p,
                  preferred_element_type=jnp.float32) + b2p
    out = out.astype(jnp.bfloat16)
    return out[:, :OUT_DIM].astype(jnp.float32)


if __name__ == "__main__":
    key = jax.random.PRNGKey(0)
    pkey, xkey = jax.random.split(key)
    params = make_params(pkey)

    B = 8
    x = jax.random.normal(xkey, (B, IN_DIM), jnp.float32)

    out = classifier_forward(x, params)
    out = jax.block_until_ready(out)

    ref = reference_forward(x, params)
    assert out.shape == (B, OUT_DIM), out.shape
    assert jnp.allclose(out, ref, atol=5e-2, rtol=5e-2), "mismatch vs reference"

    print("KERNEL_OK")
</pallas_src>

<mosaic_0001>
module attributes {stable_mosaic.version = 11 : i64} {
  func.func @classifier_kernel(%arg0: i32, %arg1: memref<8x512xf32, #tpu.memory_space<vmem>>, %arg2: memref<512x1024xbf16, #tpu.memory_space<vmem>>, %arg3: memref<1x1024xf32, #tpu.memory_space<vmem>>, %arg4: memref<1024x128xbf16, #tpu.memory_space<vmem>>, %arg5: memref<1x128xf32, #tpu.memory_space<vmem>>, %arg6: memref<8x128xbf16, #tpu.memory_space<vmem>>) attributes {dimension_semantics = [#tpu.dimension_semantics<parallel>], iteration_bounds = array<i64: 1>, scalar_prefetch = 0 : i64, scratch_operands = 0 : i64, tpu.core_type = #tpu.core_type<tc>, window_params = [{transform_indices = @transform_0, window_bounds = array<i64: 8, 512>}, {pipeline_mode = #tpu.pipeline_mode<synchronous>, transform_indices = @transform_1, window_bounds = array<i64: 512, 1024>}, {pipeline_mode = #tpu.pipeline_mode<synchronous>, transform_indices = @transform_2, window_bounds = array<i64: 1, 1024>}, {pipeline_mode = #tpu.pipeline_mode<synchronous>, transform_indices = @transform_3, window_bounds = array<i64: 1024, 128>}, {pipeline_mode = #tpu.pipeline_mode<synchronous>, transform_indices = @transform_4, window_bounds = array<i64: 1, 128>}, {transform_indices = @transform_5, window_bounds = array<i64: 8, 128>}]} {
    %c0 = arith.constant 0 : index
    %c0_0 = arith.constant 0 : index
    %0 = vector.load %arg1[%c0, %c0_0] : memref<8x512xf32, #tpu.memory_space<vmem>>, vector<8x512xf32>
    %1 = arith.truncf %0 : vector<8x512xf32> to vector<8x512xbf16>
    %c0_1 = arith.constant 0 : index
    %c0_2 = arith.constant 0 : index
    %2 = vector.load %arg2[%c0_1, %c0_2] : memref<512x1024xbf16, #tpu.memory_space<vmem>>, vector<512x1024xbf16>
    %cst = arith.constant dense<0.000000e+00> : vector<8x1024xf32>
    %3 = tpu.matmul %1, %2, %cst {dimension_numbers = #tpu.dot_dimension_numbers<[1], [0], [0], [1], [0, 0, 1, 1], [], []>} : vector<8x512xbf16>, vector<512x1024xbf16>, vector<8x1024xf32> -> vector<8x1024xf32>
    %c0_3 = arith.constant 0 : index
    %c0_4 = arith.constant 0 : index
    %4 = vector.load %arg3[%c0_3, %c0_4] : memref<1x1024xf32, #tpu.memory_space<vmem>>, vector<1x1024xf32>
    %5 = vector.broadcast %4 : vector<1x1024xf32> to vector<8x1024xf32>
    %6 = arith.addf %3, %5 : vector<8x1024xf32>
    %cst_5 = arith.constant 0.000000e+00 : f32
    %7 = vector.broadcast %cst_5 : f32 to vector<8x1024xf32>
    %8 = arith.maximumf %6, %7 : vector<8x1024xf32>
    %9 = arith.truncf %8 : vector<8x1024xf32> to vector<8x1024xbf16>
    %c0_6 = arith.constant 0 : index
    %c0_7 = arith.constant 0 : index
    %10 = vector.load %arg4[%c0_6, %c0_7] : memref<1024x128xbf16, #tpu.memory_space<vmem>>, vector<1024x128xbf16>
    %cst_8 = arith.constant dense<0.000000e+00> : vector<8x128xf32>
    %11 = tpu.matmul %9, %10, %cst_8 {dimension_numbers = #tpu.dot_dimension_numbers<[1], [0], [0], [1], [0, 0, 1, 1], [], []>} : vector<8x1024xbf16>, vector<1024x128xbf16>, vector<8x128xf32> -> vector<8x128xf32>
    %c0_9 = arith.constant 0 : index
    %c0_10 = arith.constant 0 : index
    %12 = vector.load %arg5[%c0_9, %c0_10] : memref<1x128xf32, #tpu.memory_space<vmem>>, vector<1x128xf32>
    %13 = vector.broadcast %12 : vector<1x128xf32> to vector<8x128xf32>
    %14 = arith.addf %11, %13 : vector<8x128xf32>
    %15 = arith.truncf %14 : vector<8x128xf32> to vector<8x128xbf16>
    %c0_11 = arith.constant 0 : index
    %c0_12 = arith.constant 0 : index
    %16 = vector.load %arg6[%c0_11, %c0_12] : memref<8x128xbf16, #tpu.memory_space<vmem>>, vector<8x128xbf16>
    tpu.vector_store %arg6[%c0_11, %c0_12], %15 {strides = array<i32>} : memref<8x128xbf16, #tpu.memory_space<vmem>>, vector<8x128xbf16>,
    return
  }
  func.func @transform_0(%arg0: i32) -> (i32, i32) {
    %c0_i32 = arith.constant 0 : i32
    %c0_i32_0 = arith.constant 0 : i32
    return %arg0, %c0_i32 : i32, i32
  }
  func.func @transform_1(%arg0: i32) -> (i32, i32) {
    %c0_i32 = arith.constant 0 : i32
    %c0_i32_0 = arith.constant 0 : i32
    %c0_i32_1 = arith.constant 0 : i32
    return %c0_i32, %c0_i32_0 : i32, i32
  }
  func.func @transform_2(%arg0: i32) -> (i32, i32) {
    %c0_i32 = arith.constant 0 : i32
    %c0_i32_0 = arith.constant 0 : i32
    %c0_i32_1 = arith.constant 0 : i32
    return %c0_i32, %c0_i32_0 : i32, i32
  }
  func.func @transform_3(%arg0: i32) -> (i32, i32) {
    %c0_i32 = arith.constant 0 : i32
    %c0_i32_0 = arith.constant 0 : i32
    %c0_i32_1 = arith.constant 0 : i32
    return %c0_i32, %c0_i32_0 : i32, i32
  }
  func.func @transform_4(%arg0: i32) -> (i32, i32) {
    %c0_i32 = arith.constant 0 : i32
    %c0_i32_0 = arith.constant 0 : i32
    %c0_i32_1 = arith.constant 0 : i32
    return %c0_i32, %c0_i32_0 : i32, i32
  }
  func.func @transform_5(%arg0: i32) -> (i32, i32) {
    %c0_i32 = arith.constant 0 : i32
    %c0_i32_0 = arith.constant 0 : i32
    return %arg0, %c0_i32 : i32, i32
  }
}

</mosaic_0001>

<llo_original>
// kernel: tpu_custom_call.1
$region0: #{tpu_custom_call.1}
  #allocation0 [shape = 'u32[]', space=smem, size = 0x4, offset = 0x4, fixed_abs, tag = 'smem constant byte address 0x4 - core index']
  #allocation1 [shape = 'u32[144,128]{1,0:T(1,128)}', space=vmem, size = 0x12000, scoped, tag = 'internal scratch']
  %s0 = inlined_call_operand.hbm [shape: f32[8,512], index: 0, kind: input, shape index: {}]
  %s1 = inlined_call_operand.hbm [shape: bf16[512,1024], index: 1, kind: input, shape index: {}]
  %s2 = inlined_call_operand.hbm [shape: f32[1,1024], index: 2, kind: input, shape index: {}]
  %s3 = inlined_call_operand.hbm [shape: bf16[1024,128], index: 3, kind: input, shape index: {}]
  %s4 = inlined_call_operand.vmem [shape: f32[1,128], index: 4, kind: input, shape index: {}]
  %s5 = inlined_call_operand.hbm [shape: bf16[8,128], index: 5, kind: output, shape index: {}]
  %s6 = sld [smem:[#allocation0]]
  $region46: #{tpu_custom_call.1} parent=0
    _
  %s8 = ssub.s32 1, %s6
  %s9 = scalar_select 0, %s8, %s6
  $region1: #{tpu_custom_call.1} parent=0
    #allocation2 [shape = 'u8[16384]{0}', space=vmem, size = 0x4000, scoped, tag = 'input window, operand 0, single buffered']
    #allocation3 [shape = 's32[1]{0}', space=sflag, size = 0x4, scoped, tag = 'scoped memory for tpu_custom_call.1']
    #allocation4 [shape = 's32[1]{0}', space=sflag, size = 0x4, scoped, tag = 'scoped memory for tpu_custom_call.1']
    #allocation5 [shape = 'u8[1048576]{0}', space=vmem, size = 0x100000, scoped, tag = 'input window, operand 1, single buffered']
    #allocation6 [shape = 's32[1]{0}', space=sflag, size = 0x4, scoped, tag = 'scoped memory for tpu_custom_call.1']
    #allocation7 [shape = 'u8[4096]{0}', space=vmem, size = 0x1000, scoped, tag = 'input window, operand 2, single buffered']
    #allocation8 [shape = 'u8[262144]{0}', space=vmem, size = 0x40000, scoped, tag = 'input window, operand 3, single buffered']
    #allocation9 [shape = 's32[1]{0}', space=sflag, size = 0x4, scoped, tag = 'scoped memory for tpu_custom_call.1']
    #allocation10 [shape = 'u8[2048]{0}', space=vmem, size = 0x800, scoped, tag = 'output window, operand 0, single buffered']
    %10 = vsyncpa [#allocation3], 0
    %11 = vsyncpa [#allocation6], 0
    %12 = vsyncpa [#allocation9], 0
    %13 = vsyncpa [#allocation4], 0
    // Predicated region
    $region2: #{tpu_custom_call.1} parent=1 // pred_check
      _
    $region3: #{tpu_custom_call.1} parent=1 // pred_check_branch
      %15 = sbr.rel (0) target = $region5
    $region4: #{tpu_custom_call.1} parent=1 // pred_region
      %s17 = ssub.s32 512, 512
      %18 = vsyncadd [#allocation3], %s17
      %s20 = sshll.u32 [#allocation2], 4
      %s21 = int_to_ptr.vmem [resolvable:$true] %s20
      %23 = dma.hbm_to_vmem [thread:$0]  %s0, 512, %s21, [#allocation3]
    $region5: #{tpu_custom_call.1} parent=1 // pred_fallthru
      _
    // Predicated region
    $region6: #{tpu_custom_call.1} parent=1 // pred_check
      _
    $region7: #{tpu_custom_call.1} parent=1 // pred_check_branch
      %25 = sbr.rel (0) target = $region9
    $region8: #{tpu_custom_call.1} parent=1 // pred_region
      %s27 = ssub.s32 32768, 32768
      %28 = vsyncadd [#allocation6], %s27
      %s29 = sshll.u32 [#allocation5], 4
      %s30 = int_to_ptr.vmem [resolvable:$true] %s29
      %35 = dma.hbm_to_vmem [thread:$0]  %s1, 32768, %s30, [#allocation6], 512, 512, 32
    $region9: #{tpu_custom_call.1} parent=1 // pred_fallthru
      _
    // Predicated region
    $region10: #{tpu_custom_call.1} parent=1 // pred_check
      _
    $region11: #{tpu_custom_call.1} parent=1 // pred_check_branch
      %37 = sbr.rel (0) target = $region13
    $region12: #{tpu_custom_call.1} parent=1 // pred_region
      %s39 = ssub.s32 128, 128
      %40 = vsyncadd [#allocation6], %s39
      %s42 = sshll.u32 [#allocation7], 4
      %s43 = int_to_ptr.vmem [resolvable:$true] %s42
      %45 = dma.hbm_to_vmem [thread:$0]  %s2, 128, %s43, [#allocation6]
    $region13: #{tpu_custom_call.1} parent=1 // pred_fallthru
      _
    // Predicated region
    $region14: #{tpu_custom_call.1} parent=1 // pred_check
      _
    $region15: #{tpu_custom_call.1} parent=1 // pred_check_branch
      %47 = sbr.rel (0) target = $region17
    $region16: #{tpu_custom_call.1} parent=1 // pred_region
      %s49 = ssub.s32 8192, 8192
      %50 = vsyncadd [#allocation9], %s49
      %s51 = sshll.u32 [#allocation8], 4
      %s52 = int_to_ptr.vmem [resolvable:$true] %s51
      %57 = dma.hbm_to_vmem [thread:$0]  %s3, 8192, %s52, [#allocation9], 64, 64, 4
    $region17: #{tpu_custom_call.1} parent=1 // pred_fallthru
      _
    // Predicated region
    $region18: #{tpu_custom_call.1} parent=1 // pred_check
      _
    $region19: #{tpu_custom_call.1} parent=1 // pred_check_branch
      %59 = sbr.rel (0) target = $region21
    $region20: #{tpu_custom_call.1} parent=1 // pred_region
      _
    $region21: #{tpu_custom_call.1} parent=1 // pred_fallthru
      _
    // Predicated region
    $region22: #{tpu_custom_call.1} parent=1 // pred_check
      _
    $region23: #{tpu_custom_call.1} parent=1 // pred_check_branch
      %61 = sbr.rel (0) target = $region25
    $region24: #{tpu_custom_call.1} parent=1 // pred_region
      %62 = dma.done [#allocation3], 512
    $region25: #{tpu_custom_call.1} parent=1 // pred_fallthru
      _
    // Predicated region
    $region26: #{tpu_custom_call.1} parent=1 // pred_check
      _
    $region27: #{tpu_custom_call.1} parent=1 // pred_check_branch
      %64 = sbr.rel (0) target = $region29
    $region28: #{tpu_custom_call.1} parent=1 // pred_region
      %65 = dma.done [#allocation6], 32768
    $region29: #{tpu_custom_call.1} parent=1 // pred_fallthru
      _
    // Predicated region
    $region30: #{tpu_custom_call.1} parent=1 // pred_check
      _
    $region31: #{tpu_custom_call.1} parent=1 // pred_check_branch
      %67 = sbr.rel (0) target = $region33
    $region32: #{tpu_custom_call.1} parent=1 // pred_region
      %68 = dma.done [#allocation6], 128
    $region33: #{tpu_custom_call.1} parent=1 // pred_fallthru
      _
    // Predicated region
    $region34: #{tpu_custom_call.1} parent=1 // pred_check
      _
    $region35: #{tpu_custom_call.1} parent=1 // pred_check_branch
      %70 = sbr.rel (0) target = $region37
    $region36: #{tpu_custom_call.1} parent=1 // pred_region
      %71 = dma.done [#allocation9], 8192
    $region37: #{tpu_custom_call.1} parent=1 // pred_fallthru
      _
    %v73 = vld [vmem:[#allocation2] sm:$0xff]
    %v74 = vld [vmem:[#allocation2 + $0x8] sm:$0xff]
    %v75 = vld [vmem:[#allocation2 + $0x10] sm:$0xff]
    %v76 = vld [vmem:[#allocation2 + $0x18] sm:$0xff]
    %v77 = vpack.c.bf16 %v73, %v73
    %v78 = vpack.c.bf16 %v74, %v74
    %v79 = vpack.c.bf16 %v75, %v75
    %v80 = vpack.c.bf16 %v76, %v76
    %v81 = vld [vmem:[#allocation5] sm:$0xff]
    %v82 = vld [vmem:[#allocation5 + $0x8] sm:$0xff]
    %v83 = vld [vmem:[#allocation5 + $0x10] sm:$0xff]
    %v84 = vld [vmem:[#allocation5 + $0x18] sm:$0xff]
    %v85 = vld [vmem:[#allocation5 + $0x20] sm:$0xff]
    %v86 = vld [vmem:[#allocation5 + $0x28] sm:$0xff]
    %v87 = vld [vmem:[#allocation5 + $0x30] sm:$0xff]
    %v88 = vld [vmem:[#allocation5 + $0x38] sm:$0xff]
    %v89 = vld [vmem:[#allocation5 + $0x40] sm:$0xff]
    %v90 = vld [vmem:[#allocation5 + $0x48] sm:$0xff]
    %v91 = vld [vmem:[#allocation5 + $0x50] sm:$0xff]
    %v92 = vld [vmem:[#allocation5 + $0x58] sm:$0xff]
    %v93 = vld [vmem:[#allocation5 + $0x60] sm:$0xff]
    %v94 = vld [vmem:[#allocation5 + $0x68] sm:$0xff]
    %v95 = vld [vmem:[#allocation5 + $0x70] sm:$0xff]
    %v96 = vld [vmem:[#allocation5 + $0x78] sm:$0xff]
    %v97 = vld [vmem:[#allocation5 + $0x80] sm:$0xff]
    %v98 = vld [vmem:[#allocation5 + $0x88] sm:$0xff]
    %v99 = vld [vmem:[#allocation5 + $0x90] sm:$0xff]
    %v100 = vld [vmem:[#allocation5 + $0x98] sm:$0xff]
    %v101 = vld [vmem:[#allocation5 + $0xa0] sm:$0xff]
    %v102 = vld [vmem:[#allocation5 + $0xa8] sm:$0xff]
    %v103 = vld [vmem:[#allocation5 + $0xb0] sm:$0xff]
    %v104 = vld [vmem:[#allocation5 + $0xb8] sm:$0xff]
    %v105 = vld [vmem:[#allocation5 + $0xc0] sm:$0xff]
    %v106 = vld [vmem:[#allocation5 + $0xc8] sm:$0xff]
    %v107 = vld [vmem:[#allocation5 + $0xd0] sm:$0xff]
    %v108 = vld [vmem:[#allocation5 + $0xd8] sm:$0xff]
    %v109 = vld [vmem:[#allocation5 + $0xe0] sm:$0xff]
    %v110 = vld [vmem:[#allocation5 + $0xe8] sm:$0xff]
    %v111 = vld [vmem:[#allocation5 + $0xf0] sm:$0xff]
    %v112 = vld [vmem:[#allocation5 + $0xf8] sm:$0xff]
    %v113 = vld [vmem:[#allocation5 + $0x100] sm:$0xff]
    %v114 = vld [vmem:[#allocation5 + $0x108] sm:$0xff]
    %v115 = vld [vmem:[#allocation5 + $0x110] sm:$0xff]
    %v116 = vld [vmem:[#allocation5 + $0x118] sm:$0xff]
    %v117 = vld [vmem:[#allocation5 + $0x120] sm:$0xff]
    %v118 = vld [vmem:[#allocation5 + $0x128] sm:$0xff]
    %v119 = vld [vmem:[#allocation5 + $0x130] sm:$0xff]
    %v120 = vld [vmem:[#allocation5 + $0x138] sm:$0xff]
    %v121 = vld [vmem:[#allocation5 + $0x140] sm:$0xff]
    %v122 = vld [vmem:[#allocation5 + $0x148] sm:$0xff]
    %v123 = vld [vmem:[#allocation5 + $0x150] sm:$0xff]
    %v124 = vld [vmem:[#allocation5 + $0x158] sm:$0xff]
    %v125 = vld [vmem:[#allocation5 + $0x160] sm:$0xff]
    %v126 = vld [vmem:[#allocation5 + $0x168] sm:$0xff]
    %v127 = vld [vmem:[#allocation5 + $0x170] sm:$0xff]
    %v128 = vld [vmem:[#allocation5 + $0x178] sm:$0xff]
    %v129 = vld [vmem:[#allocation5 + $0x180] sm:$0xff]
    %v130 = vld [vmem:[#allocation5 + $0x188] sm:$0xff]
    %v131 = vld [vmem:[#allocation5 + $0x190] sm:$0xff]
    %v132 = vld [vmem:[#allocation5 + $0x198] sm:$0xff]
    %v133 = vld [vmem:[#allocation5 + $0x1a0] sm:$0xff]
    %v134 = vld [vmem:[#allocation5 + $0x1a8] sm:$0xff]
    %v135 = vld [vmem:[#allocation5 + $0x1b0] sm:$0xff]
    %v136 = vld [vmem:[#allocation5 + $0x1b8] sm:$0xff]
    %v137 = vld [vmem:[#allocation5 + $0x1c0] sm:$0xff]
    %v138 = vld [vmem:[#allocation5 + $0x1c8] sm:$0xff]
    %v139 = vld [vmem:[#allocation5 + $0x1d0] sm:$0xff]
    %v140 = vld [vmem:[#allocation5 + $0x1d8] sm:$0xff]
    %v141 = vld [vmem:[#allocation5 + $0x1e0] sm:$0xff]
    %v142 = vld [vmem:[#allocation5 + $0x1e8] sm:$0xff]
    %v143 = vld [vmem:[#allocation5 + $0x1f0] sm:$0xff]
    %v144 = vld [vmem:[#allocation5 + $0x1f8] sm:$0xff]
    %v145 = vld [vmem:[#allocation5 + $0x200] sm:$0xff]
    %v146 = vld [vmem:[#allocation5 + $0x208] sm:$0xff]
    %v147 = vld [vmem:[#allocation5 + $0x210] sm:$0xff]
    %v148 = vld [vmem:[#allocation5 + $0x218] sm:$0xff]
    %v149 = vld [vmem:[#allocation5 + $0x220] sm:$0xff]
    %v150 = vld [vmem:[#allocation5 + $0x228] sm:$0xff]
    %v151 = vld [vmem:[#allocation5 + $0x230] sm:$0xff]
    %v152 = vld [vmem:[#allocation5 + $0x238] sm:$0xff]
    %v153 = vld [vmem:[#allocation5 + $0x240] sm:$0xff]
    %v154 = vld [vmem:[#allocation5 + $0x248] sm:$0xff]
    %v155 = vld [vmem:[#allocation5 + $0x250] sm:$0xff]
    %v156 = vld [vmem:[#allocation5 + $0x258] sm:$0xff]
    %v157 = vld [vmem:[#allocation5 + $0x260] sm:$0xff]
    %v158 = vld [vmem:[#allocation5 + $0x268] sm:$0xff]
    %v159 = vld [vmem:[#allocation5 + $0x270] sm:$0xff]
    %v160 = vld [vmem:[#allocation5 + $0x278] sm:$0xff]
    %v161 = vld [vmem:[#allocation5 + $0x280] sm:$0xff]
    %v162 = vld [vmem:[#allocation5 + $0x288] sm:$0xff]
    %v163 = vld [vmem:[#allocation5 + $0x290] sm:$0xff]
    %v164 = vld [vmem:[#allocation5 + $0x298] sm:$0xff]
    %v165 = vld [vmem:[#allocation5 + $0x2a0] sm:$0xff]
    %v166 = vld [vmem:[#allocation5 + $0x2a8] sm:$0xff]
    %v167 = vld [vmem:[#allocation5 + $0x2b0] sm:$0xff]
    %v168 = vld [vmem:[#allocation5 + $0x2b8] sm:$0xff]
    %v169 = vld [vmem:[#allocation5 + $0x2c0] sm:$0xff]
    %v170 = vld [vmem:[#allocation5 + $0x2c8] sm:$0xff]
    %v171 = vld [vmem:[#allocation5 + $0x2d0] sm:$0xff]
    %v172 = vld [vmem:[#allocation5 + $0x2d8] sm:$0xff]
    %v173 = vld [vmem:[#allocation5 + $0x2e0] sm:$0xff]
    %v174 = vld [vmem:[#allocation5 + $0x2e8] sm:$0xff]
    %v175 = vld [vmem:[#allocation5 + $0x2f0] sm:$0xff]
    %v176 = vld [vmem:[#allocation5 + $0x2f8] sm:$0xff]
    %v177 = vld [vmem:[#allocation5 + $0x300] sm:$0xff]
    %v178 = vld [vmem:[#allocation5 + $0x308] sm:$0xff]
    %v179 = vld [vmem:[#allocation5 + $0x310] sm:$0xff]
    %v180 = vld [vmem:[#allocation5 + $0x318] sm:$0xff]
    %v181 = vld [vmem:[#allocation5 + $0x320] sm:$0xff]
    %v182 = vld [vmem:[#allocation5 + $0x328] sm:$0xff]
    %v183 = vld [vmem:[#allocation5 + $0x330] sm:$0xff]
    %v184 = vld [vmem:[#allocation5 + $0x338] sm:$0xff]
    %v185 = vld [vmem:[#allocation5 + $0x340] sm:$0xff]
    %v186 = vld [vmem:[#allocation5 + $0x348] sm:$0xff]
    %v187 = vld [vmem:[#allocation5 + $0x350] sm:$0xff]
    %v188 = vld [vmem:[#allocation5 + $0x358] sm:$0xff]
    %v189 = vld [vmem:[#allocation5 + $0x360] sm:$0xff]
    %v190 = vld [vmem:[#allocation5 + $0x368] sm:$0xff]
    %v191 = vld [vmem:[#allocation5 + $0x370] sm:$0xff]
    %v192 = vld [vmem:[#allocation5 + $0x378] sm:$0xff]
    %v193 = vld [vmem:[#allocation5 + $0x380] sm:$0xff]
    %v194 = vld [vmem:[#allocation5 + $0x388] sm:$0xff]
    %v195 = vld [vmem:[#allocation5 + $0x390] sm:$0xff]
    %v196 = vld [vmem:[#allocation5 + $0x398] sm:$0xff]
    %v197 = vld [vmem:[#allocation5 + $0x3a0] sm:$0xff]
    %v198 = vld [vmem:[#allocation5 + $0x3a8] sm:$0xff]
    %v199 = vld [vmem:[#allocation5 + $0x3b0] sm:$0xff]
    %v200 = vld [vmem:[#allocation5 + $0x3b8] sm:$0xff]
    %v201 = vld [vmem:[#allocation5 + $0x3c0] sm:$0xff]
    %v202 = vld [vmem:[#allocation5 + $0x3c8] sm:$0xff]
    %v203 = vld [vmem:[#allocation5 + $0x3d0] sm:$0xff]
    %v204 = vld [vmem:[#allocation5 + $0x3d8] sm:$0xff]
    %v205 = vld [vmem:[#allocation5 + $0x3e0] sm:$0xff]
    %v206 = vld [vmem:[#allocation5 + $0x3e8] sm:$0xff]
    %v207 = vld [vmem:[#allocation5 + $0x3f0] sm:$0xff]
    %v208 = vld [vmem:[#allocation5 + $0x3f8] sm:$0xff]
    %v209 = vld [vmem:[#allocation5 + $0x400] sm:$0xff]
    %v210 = vld [vmem:[#allocation5 + $0x408] sm:$0xff]
    %v211 = vld [vmem:[#allocation5 + $0x410] sm:$0xff]
    %v212 = vld [vmem:[#allocation5 + $0x418] sm:$0xff]
    %v213 = vld [vmem:[#allocation5 + $0x420] sm:$0xff]
    %v214 = vld [vmem:[#allocation5 + $0x428] sm:$0xff]
    %v215 = vld [vmem:[#allocation5 + $0x430] sm:$0xff]
    %v216 = vld [vmem:[#allocation5 + $0x438] sm:$0xff]
    %v217 = vld [vmem:[#allocation5 + $0x440] sm:$0xff]
    %v218 = vld [vmem:[#allocation5 + $0x448] sm:$0xff]
    %v219 = vld [vmem:[#allocation5 + $0x450] sm:$0xff]
    %v220 = vld [vmem:[#allocation5 + $0x458] sm:$0xff]
    %v221 = vld [vmem:[#allocation5 + $0x460] sm:$0xff]
    %v222 = vld [vmem:[#allocation5 + $0x468] sm:$0xff]
    %v223 = vld [vmem:[#allocation5 + $0x470] sm:$0xff]
    %v224 = vld [vmem:[#allocation5 + $0x478] sm:$0xff]
    %v225 = vld [vmem:[#allocation5 + $0x480] sm:$0xff]
    %v226 = vld [vmem:[#allocation5 + $0x488] sm:$0xff]
    %v227 = vld [vmem:[#allocation5 + $0x490] sm:$0xff]
    %v228 = vld [vmem:[#allocation5 + $0x498] sm:$0xff]
    %v229 = vld [vmem:[#allocation5 + $0x4a0] sm:$0xff]
    %v230 = vld [vmem:[#allocation5 + $0x4a8] sm:$0xff]
    %v231 = vld [vmem:[#allocation5 + $0x4b0] sm:$0xff]
    %v232 = vld [vmem:[#allocation5 + $0x4b8] sm:$0xff]
    %v233 = vld [vmem:[#allocation5 + $0x4c0] sm:$0xff]
    %v234 = vld [vmem:[#allocation5 + $0x4c8] sm:$0xff]
    %v235 = vld [vmem:[#allocation5 + $0x4d0] sm:$0xff]
    %v236 = vld [vmem:[#allocation5 + $0x4d8] sm:$0xff]
    %v237 = vld [vmem:[#allocation5 + $0x4e0] sm:$0xff]
    %v238 = vld [vmem:[#allocation5 + $0x4e8] sm:$0xff]
    %v239 = vld [vmem:[#allocation5 + $0x4f0] sm:$0xff]
    %v240 = vld [vmem:[#allocation5 + $0x4f8] sm:$0xff]
    %v241 = vld [vmem:[#allocation5 + $0x500] sm:$0xff]
    %v242 = vld [vmem:[#allocation5 + $0x508] sm:$0xff]
    %v243 = vld [vmem:[#allocation5 + $0x510] sm:$0xff]
    %v244 = vld [vmem:[#allocation5 + $0x518] sm:$0xff]
    %v245 = vld [vmem:[#allocation5 + $0x520] sm:$0xff]
    %v246 = vld [vmem:[#allocation5 + $0x528] sm:$0xff]
    %v247 = vld [vmem:[#allocation5 + $0x530] sm:$0xff]
    %v248 = vld [vmem:[#allocation5 + $0x538] sm:$0xff]
    %v249 = vld [vmem:[#allocation5 + $0x540] sm:$0xff]
    %v250 = vld [vmem:[#allocation5 + $0x548] sm:$0xff]
    %v251 = vld [vmem:[#allocation5 + $0x550] sm:$0xff]
    %v252 = vld [vmem:[#allocation5 + $0x558] sm:$0xff]
    %v253 = vld [vmem:[#allocation5 + $0x560] sm:$0xff]
    %v254 = vld [vmem:[#allocation5 + $0x568] sm:$0xff]
    %v255 = vld [vmem:[#allocation5 + $0x570] sm:$0xff]
    %v256 = vld [vmem:[#allocation5 + $0x578] sm:$0xff]
    %v257 = vld [vmem:[#allocation5 + $0x580] sm:$0xff]
    %v258 = vld [vmem:[#allocation5 + $0x588] sm:$0xff]
    %v259 = vld [vmem:[#allocation5 + $0x590] sm:$0xff]
    %v260 = vld [vmem:[#allocation5 + $0x598] sm:$0xff]
    %v261 = vld [vmem:[#allocation5 + $0x5a0] sm:$0xff]
    %v262 = vld [vmem:[#allocation5 + $0x5a8] sm:$0xff]
    %v263 = vld [vmem:[#allocation5 + $0x5b0] sm:$0xff]
    %v264 = vld [vmem:[#allocation5 + $0x5b8] sm:$0xff]
    %v265 = vld [vmem:[#allocation5 + $0x5c0] sm:$0xff]
    %v266 = vld [vmem:[#allocation5 + $0x5c8] sm:$0xff]
    %v267 = vld [vmem:[#allocation5 + $0x5d0] sm:$0xff]
    %v268 = vld [vmem:[#allocation5 + $0x5d8] sm:$0xff]
    %v269 = vld [vmem:[#allocation5 + $0x5e0] sm:$0xff]
    %v270 = vld [vmem:[#allocation5 + $0x5e8] sm:$0xff]
    %v271 = vld [vmem:[#allocation5 + $0x5f0] sm:$0xff]
    %v272 = vld [vmem:[#allocation5 + $0x5f8] sm:$0xff]
    %v273 = vld [vmem:[#allocation5 + $0x600] sm:$0xff]
    %v274 = vld [vmem:[#allocation5 + $0x608] sm:$0xff]
    %v275 = vld [vmem:[#allocation5 + $0x610] sm:$0xff]
    %v276 = vld [vmem:[#allocation5 + $0x618] sm:$0xff]
    %v277 = vld [vmem:[#allocation5 + $0x620] sm:$0xff]
    %v278 = vld [vmem:[#allocation5 + $0x628] sm:$0xff]
    %v279 = vld [vmem:[#allocation5 + $0x630] sm:$0xff]
    %v280 = vld [vmem:[#allocation5 + $0x638] sm:$0xff]
    %v281 = vld [vmem:[#allocation5 + $0x640] sm:$0xff]
    %v282 = vld [vmem:[#allocation5 + $0x648] sm:$0xff]
    %v283 = vld [vmem:[#allocation5 + $0x650] sm:$0xff]
    %v284 = vld [vmem:[#allocation5 + $0x658] sm:$0xff]
    %v285 = vld [vmem:[#allocation5 + $0x660] sm:$0xff]
    %v286 = vld [vmem:[#allocation5 + $0x668] sm:$0xff]
    %v287 = vld [vmem:[#allocation5 + $0x670] sm:$0xff]
    %v288 = vld [vmem:[#allocation5 + $0x678] sm:$0xff]
    %v289 = vld [vmem:[#allocation5 + $0x680] sm:$0xff]
    %v290 = vld [vmem:[#allocation5 + $0x688] sm:$0xff]
    %v291 = vld [vmem:[#allocation5 + $0x690] sm:$0xff]
    %v292 = vld [vmem:[#allocation5 + $0x698] sm:$0xff]
    %v293 = vld [vmem:[#allocation5 + $0x6a0] sm:$0xff]
    %v294 = vld [vmem:[#allocation5 + $0x6a8] sm:$0xff]
    %v295 = vld [vmem:[#allocation5 + $0x6b0] sm:$0xff]
    %v296 = vld [vmem:[#allocation5 + $0x6b8] sm:$0xff]
    %v297 = vld [vmem:[#allocation5 + $0x6c0] sm:$0xff]
    %v298 = vld [vmem:[#allocation5 + $0x6c8] sm:$0xff]
    %v299 = vld [vmem:[#allocation5 + $0x6d0] sm:$0xff]
    %v300 = vld [vmem:[#allocation5 + $0x6d8] sm:$0xff]
    %v301 = vld [vmem:[#allocation5 + $0x6e0] sm:$0xff]
    %v302 = vld [vmem:[#allocation5 + $0x6e8] sm:$0xff]
    %v303 = vld [vmem:[#allocation5 + $0x6f0] sm:$0xff]
    %v304 = vld [vmem:[#allocation5 + $0x6f8] sm:$0xff]
    %v305 = vld [vmem:[#allocation5 + $0x700] sm:$0xff]
    %v306 = vld [vmem:[#allocation5 + $0x708] sm:$0xff]
    %v307 = vld [vmem:[#allocation5 + $0x710] sm:$0xff]
    %v308 = vld [vmem:[#allocation5 + $0x718] sm:$0xff]
    %v309 = vld [vmem:[#allocation5 + $0x720] sm:$0xff]
    %v310 = vld [vmem:[#allocation5 + $0x728] sm:$0xff]
    %v311 = vld [vmem:[#allocation5 + $0x730] sm:$0xff]
    %v312 = vld [vmem:[#allocation5 + $0x738] sm:$0xff]
    %v313 = vld [vmem:[#allocation5 + $0x740] sm:$0xff]
    %v314 = vld [vmem:[#allocation5 + $0x748] sm:$0xff]
    %v315 = vld [vmem:[#allocation5 + $0x750] sm:$0xff]
    %v316 = vld [vmem:[#allocation5 + $0x758] sm:$0xff]
    %v317 = vld [vmem:[#allocation5 + $0x760] sm:$0xff]
    %v318 = vld [vmem:[#allocation5 + $0x768] sm:$0xff]
    %v319 = vld [vmem:[#allocation5 + $0x770] sm:$0xff]
    %v320 = vld [vmem:[#allocation5 + $0x778] sm:$0xff]
    %v321 = vld [vmem:[#allocation5 + $0x780] sm:$0xff]
    %v322 = vld [vmem:[#allocation5 + $0x788] sm:$0xff]
    %v323 = vld [vmem:[#allocation5 + $0x790] sm:$0xff]
    %v324 = vld [vmem:[#allocation5 + $0x798] sm:$0xff]
    %v325 = vld [vmem:[#allocation5 + $0x7a0] sm:$0xff]
    %v326 = vld [vmem:[#allocation5 + $0x7a8] sm:$0xff]
    %v327 = vld [vmem:[#allocation5 + $0x7b0] sm:$0xff]
    %v328 = vld [vmem:[#allocation5 + $0x7b8] sm:$0xff]
    %v329 = vld [vmem:[#allocation5 + $0x7c0] sm:$0xff]
    %v330 = vld [vmem:[#allocation5 + $0x7c8] sm:$0xff]
    %v331 = vld [vmem:[#allocation5 + $0x7d0] sm:$0xff]
    %v332 = vld [vmem:[#allocation5 + $0x7d8] sm:$0xff]
    %v333 = vld [vmem:[#allocation5 + $0x7e0] sm:$0xff]
    %v334 = vld [vmem:[#allocation5 + $0x7e8] sm:$0xff]
    %v335 = vld [vmem:[#allocation5 + $0x7f0] sm:$0xff]
    %v336 = vld [vmem:[#allocation5 + $0x7f8] sm:$0xff]
    %v337 = vld [vmem:[#allocation7] sm:$0xff]
    %v339 = vlaneseq
    %v340 = vshrl.u32 %v339, 7
    %v341 = vsub.s32 0, %v340
    %v342 = vrot.slane %v337, %v341
    %v343 = vlaneseq
    %v344 = vshrl.u32 %v343, 7
    %v345 = vsub.s32 1, %v344
    %v346 = vrot.slane %v337, %v345
    %v347 = vlaneseq
    %v348 = vshrl.u32 %v347, 7
    %v349 = vsub.s32 2, %v348
    %v350 = vrot.slane %v337, %v349
    %v351 = vlaneseq
    %v352 = vshrl.u32 %v351, 7
    %v353 = vsub.s32 3, %v352
    %v354 = vrot.slane %v337, %v353
    %v355 = vlaneseq
    %v356 = vshrl.u32 %v355, 7
    %v357 = vsub.s32 4, %v356
    %v358 = vrot.slane %v337, %v357
    %v359 = vlaneseq
    %v360 = vshrl.u32 %v359, 7
    %v361 = vsub.s32 5, %v360
    %v362 = vrot.slane %v337, %v361
    %v363 = vlaneseq
    %v364 = vshrl.u32 %v363, 7
    %v365 = vsub.s32 6, %v364
    %v366 = vrot.slane %v337, %v365
    %v367 = vlaneseq
    %v368 = vshrl.u32 %v367, 7
    %v369 = vsub.s32 7, %v368
    %v370 = vrot.slane %v337, %v369
    %v635 = vunpack.c.l.b16 %v81
    %v636 = vunpack.c.h.b16 %v81
    %v637 = vunpack.c.l.b16 %v82
    %v638 = vunpack.c.h.b16 %v82
    %v639 = vunpack.c.l.b16 %v83
    %v640 = vunpack.c.h.b16 %v83
    %v641 = vunpack.c.l.b16 %v84
    %v642 = vunpack.c.h.b16 %v84
    %v643 = vunpack.c.l.b16 %v85
    %v644 = vunpack.c.h.b16 %v85
    %v645 = vunpack.c.l.b16 %v86
    %v646 = vunpack.c.h.b16 %v86
    %v647 = vunpack.c.l.b16 %v87
    %v648 = vunpack.c.h.b16 %v87
    %v649 = vunpack.c.l.b16 %v88
    %v650 = vunpack.c.h.b16 %v88
    %v651 = vunpack.c.l.b16 %v89
    %v652 = vunpack.c.h.b16 %v89
    %v653 = vunpack.c.l.b16 %v90
    %v654 = vunpack.c.h.b16 %v90
    %v655 = vunpack.c.l.b16 %v91
    %v656 = vunpack.c.h.b16 %v91
    %v657 = vunpack.c.l.b16 %v92
    %v658 = vunpack.c.h.b16 %v92
    %v659 = vunpack.c.l.b16 %v93
    %v660 = vunpack.c.h.b16 %v93
    %v661 = vunpack.c.l.b16 %v94
    %v662 = vunpack.c.h.b16 %v94
    %v663 = vunpack.c.l.b16 %v95
    %v664 = vunpack.c.h.b16 %v95
    %v665 = vunpack.c.l.b16 %v96
    %v666 = vunpack.c.h.b16 %v96
    %v667 = vunpack.c.l.b16 %v97
    %v668 = vunpack.c.h.b16 %v97
    %v669 = vunpack.c.l.b16 %v98
    %v670 = vunpack.c.h.b16 %v98
    %v671 = vunpack.c.l.b16 %v99
    %v672 = vunpack.c.h.b16 %v99
    %v673 = vunpack.c.l.b16 %v100
    %v674 = vunpack.c.h.b16 %v100
    %v675 = vunpack.c.l.b16 %v101
    %v676 = vunpack.c.h.b16 %v101
    %v677 = vunpack.c.l.b16 %v102
    %v678 = vunpack.c.h.b16 %v102
    %v679 = vunpack.c.l.b16 %v103
    %v680 = vunpack.c.h.b16 %v103
    %v681 = vunpack.c.l.b16 %v104
    %v682 = vunpack.c.h.b16 %v104
    %v683 = vunpack.c.l.b16 %v105
    %v684 = vunpack.c.h.b16 %v105
    %v685 = vunpack.c.l.b16 %v106
    %v686 = vunpack.c.h.b16 %v106
    %v687 = vunpack.c.l.b16 %v107
    %v688 = vunpack.c.h.b16 %v107
    %v689 = vunpack.c.l.b16 %v108
    %v690 = vunpack.c.h.b16 %v108
    %v691 = vunpack.c.l.b16 %v109
    %v692 = vunpack.c.h.b16 %v109
    %v693 = vunpack.c.l.b16 %v110
    %v694 = vunpack.c.h.b16 %v110
    %v695 = vunpack.c.l.b16 %v111
    %v696 = vunpack.c.h.b16 %v111
    %v697 = vunpack.c.l.b16 %v112
    %v698 = vunpack.c.h.b16 %v112
    %v699 = vunpack.c.l.b16 %v113
    %v700 = vunpack.c.h.b16 %v113
    %v701 = vunpack.c.l.b16 %v114
    %v702 = vunpack.c.h.b16 %v114
    %v703 = vunpack.c.l.b16 %v115
    %v704 = vunpack.c.h.b16 %v115
    %v705 = vunpack.c.l.b16 %v116
    %v706 = vunpack.c.h.b16 %v116
    %v707 = vunpack.c.l.b16 %v117
    %v708 = vunpack.c.h.b16 %v117
    %v709 = vunpack.c.l.b16 %v118
    %v710 = vunpack.c.h.b16 %v118
    %v711 = vunpack.c.l.b16 %v119
    %v712 = vunpack.c.h.b16 %v119
    %v713 = vunpack.c.l.b16 %v120
    %v714 = vunpack.c.h.b16 %v120
    %v715 = vunpack.c.l.b16 %v121
    %v716 = vunpack.c.h.b16 %v121
    %v717 = vunpack.c.l.b16 %v122
    %v718 = vunpack.c.h.b16 %v122
    %v719 = vunpack.c.l.b16 %v123
    %v720 = vunpack.c.h.b16 %v123
    %v721 = vunpack.c.l.b16 %v124
    %v722 = vunpack.c.h.b16 %v124
    %v723 = vunpack.c.l.b16 %v125
    %v724 = vunpack.c.h.b16 %v125
    %v725 = vunpack.c.l.b16 %v126
    %v726 = vunpack.c.h.b16 %v126
    %v727 = vunpack.c.l.b16 %v127
    %v728 = vunpack.c.h.b16 %v127
    %v729 = vunpack.c.l.b16 %v128
    %v730 = vunpack.c.h.b16 %v128
    %v731 = vunpack.c.l.b16 %v129
    %v732 = vunpack.c.h.b16 %v129
    %v733 = vunpack.c.l.b16 %v130
    %v734 = vunpack.c.h.b16 %v130
    %v735 = vunpack.c.l.b16 %v131
    %v736 = vunpack.c.h.b16 %v131
    %v737 = vunpack.c.l.b16 %v132
    %v738 = vunpack.c.h.b16 %v132
    %v739 = vunpack.c.l.b16 %v133
    %v740 = vunpack.c.h.b16 %v133
    %v741 = vunpack.c.l.b16 %v134
    %v742 = vunpack.c.h.b16 %v134
    %v743 = vunpack.c.l.b16 %v135
    %v744 = vunpack.c.h.b16 %v135
    %v745 = vunpack.c.l.b16 %v136
    %v746 = vunpack.c.h.b16 %v136
    %v747 = vunpack.c.l.b16 %v137
    %v748 = vunpack.c.h.b16 %v137
    %v749 = vunpack.c.l.b16 %v138
    %v750 = vunpack.c.h.b16 %v138
    %v751 = vunpack.c.l.b16 %v139
    %v752 = vunpack.c.h.b16 %v139
    %v753 = vunpack.c.l.b16 %v140
    %v754 = vunpack.c.h.b16 %v140
    %v755 = vunpack.c.l.b16 %v141
    %v756 = vunpack.c.h.b16 %v141
    %v757 = vunpack.c.l.b16 %v142
    %v758 = vunpack.c.h.b16 %v142
    %v759 = vunpack.c.l.b16 %v143
    %v760 = vunpack.c.h.b16 %v143
    %v761 = vunpack.c.l.b16 %v144
    %v762 = vunpack.c.h.b16 %v144
    %v763 = vunpack.c.l.b16 %v145
    %v764 = vunpack.c.h.b16 %v145
    %v765 = vunpack.c.l.b16 %v146
    %v766 = vunpack.c.h.b16 %v146
    %v767 = vunpack.c.l.b16 %v147
    %v768 = vunpack.c.h.b16 %v147
    %v769 = vunpack.c.l.b16 %v148
    %v770 = vunpack.c.h.b16 %v148
    %v771 = vunpack.c.l.b16 %v149
    %v772 = vunpack.c.h.b16 %v149
    %v773 = vunpack.c.l.b16 %v150
    %v774 = vunpack.c.h.b16 %v150
    %v775 = vunpack.c.l.b16 %v151
    %v776 = vunpack.c.h.b16 %v151
    %v777 = vunpack.c.l.b16 %v152
    %v778 = vunpack.c.h.b16 %v152
    %v779 = vunpack.c.l.b16 %v153
    %v780 = vunpack.c.h.b16 %v153
    %v781 = vunpack.c.l.b16 %v154
    %v782 = vunpack.c.h.b16 %v154
    %v783 = vunpack.c.l.b16 %v155
    %v784 = vunpack.c.h.b16 %v155
    %v785 = vunpack.c.l.b16 %v156
    %v786 = vunpack.c.h.b16 %v156
    %v787 = vunpack.c.l.b16 %v157
    %v788 = vunpack.c.h.b16 %v157
    %v789 = vunpack.c.l.b16 %v158
    %v790 = vunpack.c.h.b16 %v158
    %v791 = vunpack.c.l.b16 %v159
    %v792 = vunpack.c.h.b16 %v159
    %v793 = vunpack.c.l.b16 %v160
    %v794 = vunpack.c.h.b16 %v160
    %v795 = vunpack.c.l.b16 %v161
    %v796 = vunpack.c.h.b16 %v161
    %v797 = vunpack.c.l.b16 %v162
    %v798 = vunpack.c.h.b16 %v162
    %v799 = vunpack.c.l.b16 %v163
    %v800 = vunpack.c.h.b16 %v163
    %v801 = vunpack.c.l.b16 %v164
    %v802 = vunpack.c.h.b16 %v164
    %v803 = vunpack.c.l.b16 %v165
    %v804 = vunpack.c.h.b16 %v165
    %v805 = vunpack.c.l.b16 %v166
    %v806 = vunpack.c.h.b16 %v166
    %v807 = vunpack.c.l.b16 %v167
    %v808 = vunpack.c.h.b16 %v167
    %v809 = vunpack.c.l.b16 %v168
    %v810 = vunpack.c.h.b16 %v168
    %v811 = vunpack.c.l.b16 %v169
    %v812 = vunpack.c.h.b16 %v169
    %v813 = vunpack.c.l.b16 %v170
    %v814 = vunpack.c.h.b16 %v170
    %v815 = vunpack.c.l.b16 %v171
    %v816 = vunpack.c.h.b16 %v171
    %v817 = vunpack.c.l.b16 %v172
    %v818 = vunpack.c.h.b16 %v172
    %v819 = vunpack.c.l.b16 %v173
    %v820 = vunpack.c.h.b16 %v173
    %v821 = vunpack.c.l.b16 %v174
    %v822 = vunpack.c.h.b16 %v174
    %v823 = vunpack.c.l.b16 %v175
    %v824 = vunpack.c.h.b16 %v175
    %v825 = vunpack.c.l.b16 %v176
    %v826 = vunpack.c.h.b16 %v176
    %v827 = vunpack.c.l.b16 %v177
    %v828 = vunpack.c.h.b16 %v177
    %v829 = vunpack.c.l.b16 %v178
    %v830 = vunpack.c.h.b16 %v178
    %v831 = vunpack.c.l.b16 %v179
    %v832 = vunpack.c.h.b16 %v179
    %v833 = vunpack.c.l.b16 %v180
    %v834 = vunpack.c.h.b16 %v180
    %v835 = vunpack.c.l.b16 %v181
    %v836 = vunpack.c.h.b16 %v181
    %v837 = vunpack.c.l.b16 %v182
    %v838 = vunpack.c.h.b16 %v182
    %v839 = vunpack.c.l.b16 %v183
    %v840 = vunpack.c.h.b16 %v183
    %v841 = vunpack.c.l.b16 %v184
    %v842 = vunpack.c.h.b16 %v184
    %v843 = vunpack.c.l.b16 %v185
    %v844 = vunpack.c.h.b16 %v185
    %v845 = vunpack.c.l.b16 %v186
    %v846 = vunpack.c.h.b16 %v186
    %v847 = vunpack.c.l.b16 %v187
    %v848 = vunpack.c.h.b16 %v187
    %v849 = vunpack.c.l.b16 %v188
    %v850 = vunpack.c.h.b16 %v188
    %v851 = vunpack.c.l.b16 %v189
    %v852 = vunpack.c.h.b16 %v189
    %v853 = vunpack.c.l.b16 %v190
    %v854 = vunpack.c.h.b16 %v190
    %v855 = vunpack.c.l.b16 %v191
    %v856 = vunpack.c.h.b16 %v191
    %v857 = vunpack.c.l.b16 %v192
    %v858 = vunpack.c.h.b16 %v192
    %v859 = vunpack.c.l.b16 %v193
    %v860 = vunpack.c.h.b16 %v193
    %v861 = vunpack.c.l.b16 %v194
    %v862 = vunpack.c.h.b16 %v194
    %v863 = vunpack.c.l.b16 %v195
    %v864 = vunpack.c.h.b16 %v195
    %v865 = vunpack.c.l.b16 %v196
    %v866 = vunpack.c.h.b16 %v196
    %v867 = vunpack.c.l.b16 %v197
    %v868 = vunpack.c.h.b16 %v197
    %v869 = vunpack.c.l.b16 %v198
    %v870 = vunpack.c.h.b16 %v198
    %v871 = vunpack.c.l.b16 %v199
    %v872 = vunpack.c.h.b16 %v199
    %v873 = vunpack.c.l.b16 %v200
    %v874 = vunpack.c.h.b16 %v200
    %v875 = vunpack.c.l.b16 %v201
    %v876 = vunpack.c.h.b16 %v201
    %v877 = vunpack.c.l.b16 %v202
    %v878 = vunpack.c.h.b16 %v202
    %v879 = vunpack.c.l.b16 %v203
    %v880 = vunpack.c.h.b16 %v203
    %v881 = vunpack.c.l.b16 %v204
    %v882 = vunpack.c.h.b16 %v204
    %v883 = vunpack.c.l.b16 %v205
    %v884 = vunpack.c.h.b16 %v205
    %v885 = vunpack.c.l.b16 %v206
    %v886 = vunpack.c.h.b16 %v206
    %v887 = vunpack.c.l.b16 %v207
    %v888 = vunpack.c.h.b16 %v207
    %v889 = vunpack.c.l.b16 %v208
    %v890 = vunpack.c.h.b16 %v208
    %v891 = vunpack.c.l.b16 %v209
    %v892 = vunpack.c.h.b16 %v209
    %v893 = vunpack.c.l.b16 %v210
    %v894 = vunpack.c.h.b16 %v210
    %v895 = vunpack.c.l.b16 %v211
    %v896 = vunpack.c.h.b16 %v211
    %v897 = vunpack.c.l.b16 %v212
    %v898 = vunpack.c.h.b16 %v212
    %v899 = vunpack.c.l.b16 %v213
    %v900 = vunpack.c.h.b16 %v213
    %v901 = vunpack.c.l.b16 %v214
    %v902 = vunpack.c.h.b16 %v214
    %v903 = vunpack.c.l.b16 %v215
    %v904 = vunpack.c.h.b16 %v215
    %v905 = vunpack.c.l.b16 %v216
    %v906 = vunpack.c.h.b16 %v216
    %v907 = vunpack.c.l.b16 %v217
    %v908 = vunpack.c.h.b16 %v217
    %v909 = vunpack.c.l.b16 %v218
    %v910 = vunpack.c.h.b16 %v218
    %v911 = vunpack.c.l.b16 %v219
    %v912 = vunpack.c.h.b16 %v219
    %v913 = vunpack.c.l.b16 %v220
    %v914 = vunpack.c.h.b16 %v220
    %v915 = vunpack.c.l.b16 %v221
    %v916 = vunpack.c.h.b16 %v221
    %v917 = vunpack.c.l.b16 %v222
    %v918 = vunpack.c.h.b16 %v222
    %v919 = vunpack.c.l.b16 %v223
    %v920 = vunpack.c.h.b16 %v223
    %v921 = vunpack.c.l.b16 %v224
    %v922 = vunpack.c.h.b16 %v224
    %v923 = vunpack.c.l.b16 %v225
    %v924 = vunpack.c.h.b16 %v225
    %v925 = vunpack.c.l.b16 %v226
    %v926 = vunpack.c.h.b16 %v226
    %v927 = vunpack.c.l.b16 %v227
    %v928 = vunpack.c.h.b16 %v227
    %v929 = vunpack.c.l.b16 %v228
    %v930 = vunpack.c.h.b16 %v228
    %v931 = vunpack.c.l.b16 %v229
    %v932 = vunpack.c.h.b16 %v229
    %v933 = vunpack.c.l.b16 %v230
    %v934 = vunpack.c.h.b16 %v230
    %v935 = vunpack.c.l.b16 %v231
    %v936 = vunpack.c.h.b16 %v231
    %v937 = vunpack.c.l.b16 %v232
    %v938 = vunpack.c.h.b16 %v232
    %v939 = vunpack.c.l.b16 %v233
    %v940 = vunpack.c.h.b16 %v233
    %v941 = vunpack.c.l.b16 %v234
    %v942 = vunpack.c.h.b16 %v234
    %v943 = vunpack.c.l.b16 %v235
    %v944 = vunpack.c.h.b16 %v235
    %v945 = vunpack.c.l.b16 %v236
    %v946 = vunpack.c.h.b16 %v236
    %v947 = vunpack.c.l.b16 %v237
    %v948 = vunpack.c.h.b16 %v237
    %v949 = vunpack.c.l.b16 %v238
    %v950 = vunpack.c.h.b16 %v238
    %v951 = vunpack.c.l.b16 %v239
    %v952 = vunpack.c.h.b16 %v239
    %v953 = vunpack.c.l.b16 %v240
    %v954 = vunpack.c.h.b16 %v240
    %v955 = vunpack.c.l.b16 %v241
    %v956 = vunpack.c.h.b16 %v241
    %v957 = vunpack.c.l.b16 %v242
    %v958 = vunpack.c.h.b16 %v242
    %v959 = vunpack.c.l.b16 %v243
    %v960 = vunpack.c.h.b16 %v243
    %v961 = vunpack.c.l.b16 %v244
    %v962 = vunpack.c.h.b16 %v244
    %v963 = vunpack.c.l.b16 %v245
    %v964 = vunpack.c.h.b16 %v245
    %v965 = vunpack.c.l.b16 %v246
    %v966 = vunpack.c.h.b16 %v246
    %v967 = vunpack.c.l.b16 %v247
    %v968 = vunpack.c.h.b16 %v247
    %v969 = vunpack.c.l.b16 %v248
    %v970 = vunpack.c.h.b16 %v248
    %v971 = vunpack.c.l.b16 %v249
    %v972 = vunpack.c.h.b16 %v249
    %v973 = vunpack.c.l.b16 %v250
    %v974 = vunpack.c.h.b16 %v250
    %v975 = vunpack.c.l.b16 %v251
    %v976 = vunpack.c.h.b16 %v251
    %v977 = vunpack.c.l.b16 %v252
    %v978 = vunpack.c.h.b16 %v252
    %v979 = vunpack.c.l.b16 %v253
    %v980 = vunpack.c.h.b16 %v253
    %v981 = vunpack.c.l.b16 %v254
    %v982 = vunpack.c.h.b16 %v254
    %v983 = vunpack.c.l.b16 %v255
    %v984 = vunpack.c.h.b16 %v255
    %v985 = vunpack.c.l.b16 %v256
    %v986 = vunpack.c.h.b16 %v256
    %v987 = vunpack.c.l.b16 %v257
    %v988 = vunpack.c.h.b16 %v257
    %v989 = vunpack.c.l.b16 %v258
    %v990 = vunpack.c.h.b16 %v258
    %v991 = vunpack.c.l.b16 %v259
    %v992 = vunpack.c.h.b16 %v259
    %v993 = vunpack.c.l.b16 %v260
    %v994 = vunpack.c.h.b16 %v260
    %v995 = vunpack.c.l.b16 %v261
    %v996 = vunpack.c.h.b16 %v261
    %v997 = vunpack.c.l.b16 %v262
    %v998 = vunpack.c.h.b16 %v262
    %v999 = vunpack.c.l.b16 %v263
    %v1000 = vunpack.c.h.b16 %v263
    %v1001 = vunpack.c.l.b16 %v264
    %v1002 = vunpack.c.h.b16 %v264
    %v1003 = vunpack.c.l.b16 %v265
    %v1004 = vunpack.c.h.b16 %v265
    %v1005 = vunpack.c.l.b16 %v266
    %v1006 = vunpack.c.h.b16 %v266
    %v1007 = vunpack.c.l.b16 %v267
    %v1008 = vunpack.c.h.b16 %v267
    %v1009 = vunpack.c.l.b16 %v268
    %v1010 = vunpack.c.h.b16 %v268
    %v1011 = vunpack.c.l.b16 %v269
    %v1012 = vunpack.c.h.b16 %v269
    %v1013 = vunpack.c.l.b16 %v270
    %v1014 = vunpack.c.h.b16 %v270
    %v1015 = vunpack.c.l.b16 %v271
    %v1016 = vunpack.c.h.b16 %v271
    %v1017 = vunpack.c.l.b16 %v272
    %v1018 = vunpack.c.h.b16 %v272
    %v1019 = vunpack.c.l.b16 %v273
    %v1020 = vunpack.c.h.b16 %v273
    %v1021 = vunpack.c.l.b16 %v274
    %v1022 = vunpack.c.h.b16 %v274
    %v1023 = vunpack.c.l.b16 %v275
    %v1024 = vunpack.c.h.b16 %v275
    %v1025 = vunpack.c.l.b16 %v276
    %v1026 = vunpack.c.h.b16 %v276
    %v1027 = vunpack.c.l.b16 %v277
    %v1028 = vunpack.c.h.b16 %v277
    %v1029 = vunpack.c.l.b16 %v278
    %v1030 = vunpack.c.h.b16 %v278
    %v1031 = vunpack.c.l.b16 %v279
    %v1032 = vunpack.c.h.b16 %v279
    %v1033 = vunpack.c.l.b16 %v280
    %v1034 = vunpack.c.h.b16 %v280
    %v1035 = vunpack.c.l.b16 %v281
    %v1036 = vunpack.c.h.b16 %v281
    %v1037 = vunpack.c.l.b16 %v282
    %v1038 = vunpack.c.h.b16 %v282
    %v1039 = vunpack.c.l.b16 %v283
    %v1040 = vunpack.c.h.b16 %v283
    %v1041 = vunpack.c.l.b16 %v284
    %v1042 = vunpack.c.h.b16 %v284
    %v1043 = vunpack.c.l.b16 %v285
    %v1044 = vunpack.c.h.b16 %v285
    %v1045 = vunpack.c.l.b16 %v286
    %v1046 = vunpack.c.h.b16 %v286
    %v1047 = vunpack.c.l.b16 %v287
    %v1048 = vunpack.c.h.b16 %v287
    %v1049 = vunpack.c.l.b16 %v288
    %v1050 = vunpack.c.h.b16 %v288
    %v1051 = vunpack.c.l.b16 %v289
    %v1052 = vunpack.c.h.b16 %v289
    %v1053 = vunpack.c.l.b16 %v290
    %v1054 = vunpack.c.h.b16 %v290
    %v1055 = vunpack.c.l.b16 %v291
    %v1056 = vunpack.c.h.b16 %v291
    %v1057 = vunpack.c.l.b16 %v292
    %v1058 = vunpack.c.h.b16 %v292
    %v1059 = vunpack.c.l.b16 %v293
    %v1060 = vunpack.c.h.b16 %v293
    %v1061 = vunpack.c.l.b16 %v294
    %v1062 = vunpack.c.h.b16 %v294
    %v1063 = vunpack.c.l.b16 %v295
    %v1064 = vunpack.c.h.b16 %v295
    %v1065 = vunpack.c.l.b16 %v296
    %v1066 = vunpack.c.h.b16 %v296
    %v1067 = vunpack.c.l.b16 %v297
    %v1068 = vunpack.c.h.b16 %v297
    %v1069 = vunpack.c.l.b16 %v298
    %v1070 = vunpack.c.h.b16 %v298
    %v1071 = vunpack.c.l.b16 %v299
    %v1072 = vunpack.c.h.b16 %v299
    %v1073 = vunpack.c.l.b16 %v300
    %v1074 = vunpack.c.h.b16 %v300
    %v1075 = vunpack.c.l.b16 %v301
    %v1076 = vunpack.c.h.b16 %v301
    %v1077 = vunpack.c.l.b16 %v302
    %v1078 = vunpack.c.h.b16 %v302
    %v1079 = vunpack.c.l.b16 %v303
    %v1080 = vunpack.c.h.b16 %v303
    %v1081 = vunpack.c.l.b16 %v304
    %v1082 = vunpack.c.h.b16 %v304
    %v1083 = vunpack.c.l.b16 %v305
    %v1084 = vunpack.c.h.b16 %v305
    %v1085 = vunpack.c.l.b16 %v306
    %v1086 = vunpack.c.h.b16 %v306
    %v1087 = vunpack.c.l.b16 %v307
    %v1088 = vunpack.c.h.b16 %v307
    %v1089 = vunpack.c.l.b16 %v308
    %v1090 = vunpack.c.h.b16 %v308
    %v1091 = vunpack.c.l.b16 %v309
    %v1092 = vunpack.c.h.b16 %v309
    %v1093 = vunpack.c.l.b16 %v310
    %v1094 = vunpack.c.h.b16 %v310
    %v1095 = vunpack.c.l.b16 %v311
    %v1096 = vunpack.c.h.b16 %v311
    %v1097 = vunpack.c.l.b16 %v312
    %v1098 = vunpack.c.h.b16 %v312
    %v1099 = vunpack.c.l.b16 %v313
    %v1100 = vunpack.c.h.b16 %v313
    %v1101 = vunpack.c.l.b16 %v314
    %v1102 = vunpack.c.h.b16 %v314
    %v1103 = vunpack.c.l.b16 %v315
    %v1104 = vunpack.c.h.b16 %v315
    %v1105 = vunpack.c.l.b16 %v316
    %v1106 = vunpack.c.h.b16 %v316
    %v1107 = vunpack.c.l.b16 %v317
    %v1108 = vunpack.c.h.b16 %v317
    %v1109 = vunpack.c.l.b16 %v318
    %v1110 = vunpack.c.h.b16 %v318
    %v1111 = vunpack.c.l.b16 %v319
    %v1112 = vunpack.c.h.b16 %v319
    %v1113 = vunpack.c.l.b16 %v320
    %v1114 = vunpack.c.h.b16 %v320
    %v1115 = vunpack.c.l.b16 %v321
    %v1116 = vunpack.c.h.b16 %v321
    %v1117 = vunpack.c.l.b16 %v322
    %v1118 = vunpack.c.h.b16 %v322
    %v1119 = vunpack.c.l.b16 %v323
    %v1120 = vunpack.c.h.b16 %v323
    %v1121 = vunpack.c.l.b16 %v324
    %v1122 = vunpack.c.h.b16 %v324
    %v1123 = vunpack.c.l.b16 %v325
    %v1124 = vunpack.c.h.b16 %v325
    %v1125 = vunpack.c.l.b16 %v326
    %v1126 = vunpack.c.h.b16 %v326
    %v1127 = vunpack.c.l.b16 %v327
    %v1128 = vunpack.c.h.b16 %v327
    %v1129 = vunpack.c.l.b16 %v328
    %v1130 = vunpack.c.h.b16 %v328
    %v1131 = vunpack.c.l.b16 %v329
    %v1132 = vunpack.c.h.b16 %v329
    %v1133 = vunpack.c.l.b16 %v330
    %v1134 = vunpack.c.h.b16 %v330
    %v1135 = vunpack.c.l.b16 %v331
    %v1136 = vunpack.c.h.b16 %v331
    %v1137 = vunpack.c.l.b16 %v332
    %v1138 = vunpack.c.h.b16 %v332
    %v1139 = vunpack.c.l.b16 %v333
    %v1140 = vunpack.c.h.b16 %v333
    %v1141 = vunpack.c.l.b16 %v334
    %v1142 = vunpack.c.h.b16 %v334
    %v1143 = vunpack.c.l.b16 %v335
    %v1144 = vunpack.c.h.b16 %v335
    %v1145 = vunpack.c.l.b16 %v336
    %v1146 = vunpack.c.h.b16 %v336
    %v1147 = vpack.c.b16 %v643, %v635
    %v1148 = vpack.c.b16 %v644, %v636
    %v1149 = vpack.c.b16 %v645, %v637
    %v1150 = vpack.c.b16 %v646, %v638
    %v1151 = vpack.c.b16 %v647, %v639
    %v1152 = vpack.c.b16 %v648, %v640
    %v1153 = vpack.c.b16 %v649, %v641
    %v1154 = vpack.c.b16 %v650, %v642
    %v1155 = vpack.c.b16 %v659, %v651
    %v1156 = vpack.c.b16 %v660, %v652
    %v1157 = vpack.c.b16 %v661, %v653
    %v1158 = vpack.c.b16 %v662, %v654
    %v1159 = vpack.c.b16 %v663, %v655
    %v1160 = vpack.c.b16 %v664, %v656
    %v1161 = vpack.c.b16 %v665, %v657
    %v1162 = vpack.c.b16 %v666, %v658
    %v1163 = vpack.c.b16 %v675, %v667
    %v1164 = vpack.c.b16 %v676, %v668
    %v1165 = vpack.c.b16 %v677, %v669
    %v1166 = vpack.c.b16 %v678, %v670
    %v1167 = vpack.c.b16 %v679, %v671
    %v1168 = vpack.c.b16 %v680, %v672
    %v1169 = vpack.c.b16 %v681, %v673
    %v1170 = vpack.c.b16 %v682, %v674
    %v1171 = vpack.c.b16 %v691, %v683
    %v1172 = vpack.c.b16 %v692, %v684
    %v1173 = vpack.c.b16 %v693, %v685
    %v1174 = vpack.c.b16 %v694, %v686
    %v1175 = vpack.c.b16 %v695, %v687
    %v1176 = vpack.c.b16 %v696, %v688
    %v1177 = vpack.c.b16 %v697, %v689
    %v1178 = vpack.c.b16 %v698, %v690
    %v1179 = vpack.c.b16 %v707, %v699
    %v1180 = vpack.c.b16 %v708, %v700
    %v1181 = vpack.c.b16 %v709, %v701
    %v1182 = vpack.c.b16 %v710, %v702
    %v1183 = vpack.c.b16 %v711, %v703
    %v1184 = vpack.c.b16 %v712, %v704
    %v1185 = vpack.c.b16 %v713, %v705
    %v1186 = vpack.c.b16 %v714, %v706
    %v1187 = vpack.c.b16 %v723, %v715
    %v1188 = vpack.c.b16 %v724, %v716
    %v1189 = vpack.c.b16 %v725, %v717
    %v1190 = vpack.c.b16 %v726, %v718
    %v1191 = vpack.c.b16 %v727, %v719
    %v1192 = vpack.c.b16 %v728, %v720
    %v1193 = vpack.c.b16 %v729, %v721
    %v1194 = vpack.c.b16 %v730, %v722
    %v1195 = vpack.c.b16 %v739, %v731
    %v1196 = vpack.c.b16 %v740, %v732
    %v1197 = vpack.c.b16 %v741, %v733
    %v1198 = vpack.c.b16 %v742, %v734
    %v1199 = vpack.c.b16 %v743, %v735
    %v1200 = vpack.c.b16 %v744, %v736
    %v1201 = vpack.c.b16 %v745, %v737
    %v1202 = vpack.c.b16 %v746, %v738
    %v1203 = vpack.c.b16 %v755, %v747
    %v1204 = vpack.c.b16 %v756, %v748
    %v1205 = vpack.c.b16 %v757, %v749
    %v1206 = vpack.c.b16 %v758, %v750
    %v1207 = vpack.c.b16 %v759, %v751
    %v1208 = vpack.c.b16 %v760, %v752
    %v1209 = vpack.c.b16 %v761, %v753
    %v1210 = vpack.c.b16 %v762, %v754
    %v1211 = vpack.c.b16 %v771, %v763
    %v1212 = vpack.c.b16 %v772, %v764
    %v1213 = vpack.c.b16 %v773, %v765
    %v1214 = vpack.c.b16 %v774, %v766
    %v1215 = vpack.c.b16 %v775, %v767
    %v1216 = vpack.c.b16 %v776, %v768
    %v1217 = vpack.c.b16 %v777, %v769
    %v1218 = vpack.c.b16 %v778, %v770
    %v1219 = vpack.c.b16 %v787, %v779
    %v1220 = vpack.c.b16 %v788, %v780
    %v1221 = vpack.c.b16 %v789, %v781
    %v1222 = vpack.c.b16 %v790, %v782
    %v1223 = vpack.c.b16 %v791, %v783
    %v1224 = vpack.c.b16 %v792, %v784
    %v1225 = vpack.c.b16 %v793, %v785
    %v1226 = vpack.c.b16 %v794, %v786
    %v1227 = vpack.c.b16 %v803, %v795
    %v1228 = vpack.c.b16 %v804, %v796
    %v1229 = vpack.c.b16 %v805, %v797
    %v1230 = vpack.c.b16 %v806, %v798
    %v1231 = vpack.c.b16 %v807, %v799
    %v1232 = vpack.c.b16 %v808, %v800
    %v1233 = vpack.c.b16 %v809, %v801
    %v1234 = vpack.c.b16 %v810, %v802
    %v1235 = vpack.c.b16 %v819, %v811
    %v1236 = vpack.c.b16 %v820, %v812
    %v1237 = vpack.c.b16 %v821, %v813
    %v1238 = vpack.c.b16 %v822, %v814
    %v1239 = vpack.c.b16 %v823, %v815
    %v1240 = vpack.c.b16 %v824, %v816
    %v1241 = vpack.c.b16 %v825, %v817
    %v1242 = vpack.c.b16 %v826, %v818
    %v1243 = vpack.c.b16 %v835, %v827
    %v1244 = vpack.c.b16 %v836, %v828
    %v1245 = vpack.c.b16 %v837, %v829
    %v1246 = vpack.c.b16 %v838, %v830
    %v1247 = vpack.c.b16 %v839, %v831
    %v1248 = vpack.c.b16 %v840, %v832
    %v1249 = vpack.c.b16 %v841, %v833
    %v1250 = vpack.c.b16 %v842, %v834
    %v1251 = vpack.c.b16 %v851, %v843
    %v1252 = vpack.c.b16 %v852, %v844
    %v1253 = vpack.c.b16 %v853, %v845
    %v1254 = vpack.c.b16 %v854, %v846
    %v1255 = vpack.c.b16 %v855, %v847
    %v1256 = vpack.c.b16 %v856, %v848
    %v1257 = vpack.c.b16 %v857, %v849
    %v1258 = vpack.c.b16 %v858, %v850
    %v1259 = vpack.c.b16 %v867, %v859
    %v1260 = vpack.c.b16 %v868, %v860
    %v1261 = vpack.c.b16 %v869, %v861
    %v1262 = vpack.c.b16 %v870, %v862
    %v1263 = vpack.c.b16 %v871, %v863
    %v1264 = vpack.c.b16 %v872, %v864
    %v1265 = vpack.c.b16 %v873, %v865
    %v1266 = vpack.c.b16 %v874, %v866
    %v1267 = vpack.c.b16 %v883, %v875
    %v1268 = vpack.c.b16 %v884, %v876
    %v1269 = vpack.c.b16 %v885, %v877
    %v1270 = vpack.c.b16 %v886, %v878
    %v1271 = vpack.c.b16 %v887, %v879
    %v1272 = vpack.c.b16 %v888, %v880
    %v1273 = vpack.c.b16 %v889, %v881
    %v1274 = vpack.c.b16 %v890, %v882
    %v1275 = vpack.c.b16 %v899, %v891
    %v1276 = vpack.c.b16 %v900, %v892
    %v1277 = vpack.c.b16 %v901, %v893
    %v1278 = vpack.c.b16 %v902, %v894
    %v1279 = vpack.c.b16 %v903, %v895
    %v1280 = vpack.c.b16 %v904, %v896
    %v1281 = vpack.c.b16 %v905, %v897
    %v1282 = vpack.c.b16 %v906, %v898
    %v1283 = vpack.c.b16 %v915, %v907
    %v1284 = vpack.c.b16 %v916, %v908
    %v1285 = vpack.c.b16 %v917, %v909
    %v1286 = vpack.c.b16 %v918, %v910
    %v1287 = vpack.c.b16 %v919, %v911
    %v1288 = vpack.c.b16 %v920, %v912
    %v1289 = vpack.c.b16 %v921, %v913
    %v1290 = vpack.c.b16 %v922, %v914
    %v1291 = vpack.c.b16 %v931, %v923
    %v1292 = vpack.c.b16 %v932, %v924
    %v1293 = vpack.c.b16 %v933, %v925
    %v1294 = vpack.c.b16 %v934, %v926
    %v1295 = vpack.c.b16 %v935, %v927
    %v1296 = vpack.c.b16 %v936, %v928
    %v1297 = vpack.c.b16 %v937, %v929
    %v1298 = vpack.c.b16 %v938, %v930
    %v1299 = vpack.c.b16 %v947, %v939
    %v1300 = vpack.c.b16 %v948, %v940
    %v1301 = vpack.c.b16 %v949, %v941
    %v1302 = vpack.c.b16 %v950, %v942
    %v1303 = vpack.c.b16 %v951, %v943
    %v1304 = vpack.c.b16 %v952, %v944
    %v1305 = vpack.c.b16 %v953, %v945
    %v1306 = vpack.c.b16 %v954, %v946
    %v1307 = vpack.c.b16 %v963, %v955
    %v1308 = vpack.c.b16 %v964, %v956
    %v1309 = vpack.c.b16 %v965, %v957
    %v1310 = vpack.c.b16 %v966, %v958
    %v1311 = vpack.c.b16 %v967, %v959
    %v1312 = vpack.c.b16 %v968, %v960
    %v1313 = vpack.c.b16 %v969, %v961
    %v1314 = vpack.c.b16 %v970, %v962
    %v1315 = vpack.c.b16 %v979, %v971
    %v1316 = vpack.c.b16 %v980, %v972
    %v1317 = vpack.c.b16 %v981, %v973
    %v1318 = vpack.c.b16 %v982, %v974
    %v1319 = vpack.c.b16 %v983, %v975
    %v1320 = vpack.c.b16 %v984, %v976
    %v1321 = vpack.c.b16 %v985, %v977
    %v1322 = vpack.c.b16 %v986, %v978
    %v1323 = vpack.c.b16 %v995, %v987
    %v1324 = vpack.c.b16 %v996, %v988
    %v1325 = vpack.c.b16 %v997, %v989
    %v1326 = vpack.c.b16 %v998, %v990
    %v1327 = vpack.c.b16 %v999, %v991
    %v1328 = vpack.c.b16 %v1000, %v992
    %v1329 = vpack.c.b16 %v1001, %v993
    %v1330 = vpack.c.b16 %v1002, %v994
    %v1331 = vpack.c.b16 %v1011, %v1003
    %v1332 = vpack.c.b16 %v1012, %v1004
    %v1333 = vpack.c.b16 %v1013, %v1005
    %v1334 = vpack.c.b16 %v1014, %v1006
    %v1335 = vpack.c.b16 %v1015, %v1007
    %v1336 = vpack.c.b16 %v1016, %v1008
    %v1337 = vpack.c.b16 %v1017, %v1009
    %v1338 = vpack.c.b16 %v1018, %v1010
    %v1339 = vpack.c.b16 %v1027, %v1019
    %v1340 = vpack.c.b16 %v1028, %v1020
    %v1341 = vpack.c.b16 %v1029, %v1021
    %v1342 = vpack.c.b16 %v1030, %v1022
    %v1343 = vpack.c.b16 %v1031, %v1023
    %v1344 = vpack.c.b16 %v1032, %v1024
    %v1345 = vpack.c.b16 %v1033, %v1025
    %v1346 = vpack.c.b16 %v1034, %v1026
    %v1347 = vpack.c.b16 %v1043, %v1035
    %v1348 = vpack.c.b16 %v1044, %v1036
    %v1349 = vpack.c.b16 %v1045, %v1037
    %v1350 = vpack.c.b16 %v1046, %v1038
    %v1351 = vpack.c.b16 %v1047, %v1039
    %v1352 = vpack.c.b16 %v1048, %v1040
    %v1353 = vpack.c.b16 %v1049, %v1041
    %v1354 = vpack.c.b16 %v1050, %v1042
    %v1355 = vpack.c.b16 %v1059, %v1051
    %v1356 = vpack.c.b16 %v1060, %v1052
    %v1357 = vpack.c.b16 %v1061, %v1053
    %v1358 = vpack.c.b16 %v1062, %v1054
    %v1359 = vpack.c.b16 %v1063, %v1055
    %v1360 = vpack.c.b16 %v1064, %v1056
    %v1361 = vpack.c.b16 %v1065, %v1057
    %v1362 = vpack.c.b16 %v1066, %v1058
    %v1363 = vpack.c.b16 %v1075, %v1067
    %v1364 = vpack.c.b16 %v1076, %v1068
    %v1365 = vpack.c.b16 %v1077, %v1069
    %v1366 = vpack.c.b16 %v1078, %v1070
    %v1367 = vpack.c.b16 %v1079, %v1071
    %v1368 = vpack.c.b16 %v1080, %v1072
    %v1369 = vpack.c.b16 %v1081, %v1073
    %v1370 = vpack.c.b16 %v1082, %v1074
    %v1371 = vpack.c.b16 %v1091, %v1083
    %v1372 = vpack.c.b16 %v1092, %v1084
    %v1373 = vpack.c.b16 %v1093, %v1085
    %v1374 = vpack.c.b16 %v1094, %v1086
    %v1375 = vpack.c.b16 %v1095, %v1087
    %v1376 = vpack.c.b16 %v1096, %v1088
    %v1377 = vpack.c.b16 %v1097, %v1089
    %v1378 = vpack.c.b16 %v1098, %v1090
    %v1379 = vpack.c.b16 %v1107, %v1099
    %v1380 = vpack.c.b16 %v1108, %v1100
    %v1381 = vpack.c.b16 %v1109, %v1101
    %v1382 = vpack.c.b16 %v1110, %v1102
    %v1383 = vpack.c.b16 %v1111, %v1103
    %v1384 = vpack.c.b16 %v1112, %v1104
    %v1385 = vpack.c.b16 %v1113, %v1105
    %v1386 = vpack.c.b16 %v1114, %v1106
    %v1387 = vpack.c.b16 %v1123, %v1115
    %v1388 = vpack.c.b16 %v1124, %v1116
    %v1389 = vpack.c.b16 %v1125, %v1117
    %v1390 = vpack.c.b16 %v1126, %v1118
    %v1391 = vpack.c.b16 %v1127, %v1119
    %v1392 = vpack.c.b16 %v1128, %v1120
    %v1393 = vpack.c.b16 %v1129, %v1121
    %v1394 = vpack.c.b16 %v1130, %v1122
    %v1395 = vpack.c.b16 %v1139, %v1131
    %v1396 = vpack.c.b16 %v1140, %v1132
    %v1397 = vpack.c.b16 %v1141, %v1133
    %v1398 = vpack.c.b16 %v1142, %v1134
    %v1399 = vpack.c.b16 %v1143, %v1135
    %v1400 = vpack.c.b16 %v1144, %v1136
    %v1401 = vpack.c.b16 %v1145, %v1137
    %v1402 = vpack.c.b16 %v1146, %v1138
    %1659 = vmatprep.subr.bf16.mxu0 %v1204
    %1660 = vmatpush1.bf16.msra.mxu0 %v1203
    %1661 = vmatprep.subr.bf16.mxu0 %v1196
    %1662 = vmatpush1.bf16.msra.mxu0 %v1195
    %1663 = vmatprep.subr.bf16.mxu0 %v1188
    %1664 = vmatpush1.bf16.msra.mxu0 %v1187
    %1665 = vmatprep.subr.bf16.mxu0 %v1180
    %1666 = vmatpush1.bf16.msra.mxu0 %v1179
    %1667 = vmatprep.subr.bf16.mxu0 %v1172
    %1668 = vmatpush1.bf16.msra.mxu0 %v1171
    %1669 = vmatprep.subr.bf16.mxu0 %v1164
    %1670 = vmatpush1.bf16.msra.mxu0 %v1163
    %1671 = vmatprep.subr.bf16.mxu0 %v1156
    %1672 = vmatpush1.bf16.msra.mxu0 %v1155
    %1673 = vmatprep.subr.bf16.mxu0 %v1148
    %1674 = vmatpush1.bf16.msra.mxu0 %v1147
    %1675 = vmatprep.subr.bf16.mxu0 %v1268
    %1676 = vmatpush2.bf16.msra.mxu0 %v1267
    %1677 = vmatprep.subr.bf16.mxu0 %v1260
    %1678 = vmatpush2.bf16.msra.mxu0 %v1259
    %1679 = vmatprep.subr.bf16.mxu0 %v1252
    %1680 = vmatpush2.bf16.msra.mxu0 %v1251
    %1681 = vmatprep.subr.bf16.mxu0 %v1244
    %1682 = vmatpush2.bf16.msra.mxu0 %v1243
    %1683 = vmatprep.subr.bf16.mxu0 %v1236
    %1684 = vmatpush2.bf16.msra.mxu0 %v1235
    %1685 = vmatprep.subr.bf16.mxu0 %v1228
    %1686 = vmatpush2.bf16.msra.mxu0 %v1227
    %1687 = vmatprep.subr.bf16.mxu0 %v1220
    %1688 = vmatpush2.bf16.msra.mxu0 %v1219
    %1689 = vmatprep.subr.bf16.mxu0 %v1212
    %1690 = vmatpush2.bf16.msra.mxu0 %v1211
    %1691 = vmatprep.mubr.bf16.mxu0 %v78
    %1692 = vmatmul.mubr.bf16.gmra.mxu0 %v77
    %v1693 = vpop.f32.mrf.mxu0
    %v1694 = vadd.f32 %v342, %v1693
    %v1695 = vpop.f32.mrf.mxu0
    %v1696 = vadd.f32 %v346, %v1695
    %v1697 = vpop.f32.mrf.mxu0
    %v1698 = vpop.f32.mrf.mxu0
    %1699 = vdwg.mxu0
    %1700 = vmatprep.subr.bf16.mxu0 %v1332
    %1701 = vmatpush1.bf16.msra.mxu0 %v1331
    %1702 = vmatprep.subr.bf16.mxu0 %v1324
    %1703 = vmatpush1.bf16.msra.mxu0 %v1323
    %1704 = vmatprep.subr.bf16.mxu0 %v1316
    %1705 = vmatpush1.bf16.msra.mxu0 %v1315
    %1706 = vmatprep.subr.bf16.mxu0 %v1308
    %1707 = vmatpush1.bf16.msra.mxu0 %v1307
    %1708 = vmatprep.subr.bf16.mxu0 %v1300
    %1709 = vmatpush1.bf16.msra.mxu0 %v1299
    %1710 = vmatprep.subr.bf16.mxu0 %v1292
    %1711 = vmatpush1.bf16.msra.mxu0 %v1291
    %1712 = vmatprep.subr.bf16.mxu0 %v1284
    %1713 = vmatpush1.bf16.msra.mxu0 %v1283
    %1714 = vmatprep.subr.bf16.mxu0 %v1276
    %1715 = vmatpush1.bf16.msra.mxu0 %v1275
    %1716 = vmatprep.subr.bf16.mxu0 %v1396
    %1717 = vmatpush2.bf16.msra.mxu0 %v1395
    %1718 = vmatprep.subr.bf16.mxu0 %v1388
    %1719 = vmatpush2.bf16.msra.mxu0 %v1387
    %1720 = vmatprep.subr.bf16.mxu0 %v1380
    %1721 = vmatpush2.bf16.msra.mxu0 %v1379
    %1722 = vmatprep.subr.bf16.mxu0 %v1372
    %1723 = vmatpush2.bf16.msra.mxu0 %v1371
    %1724 = vmatprep.subr.bf16.mxu0 %v1364
    %1725 = vmatpush2.bf16.msra.mxu0 %v1363
    %1726 = vmatprep.subr.bf16.mxu0 %v1356
    %1727 = vmatpush2.bf16.msra.mxu0 %v1355
    %1728 = vmatprep.subr.bf16.mxu0 %v1348
    %1729 = vmatpush2.bf16.msra.mxu0 %v1347
    %1730 = vmatprep.subr.bf16.mxu0 %v1340
    %1731 = vmatpush2.bf16.msra.mxu0 %v1339
    %1732 = vmatprep.mubr.bf16.mxu0 %v80
    %1733 = vmatmul.mubr.bf16.gmra.mxu0 %v79
    %v1734 = vpop.f32.mrf.mxu0
    %v1735 = vadd.f32 %v1694, %v1734
    %v1736 = vpop.f32.mrf.mxu0
    %v1737 = vadd.f32 %v1696, %v1736
    %v1738 = vpop.f32.mrf.mxu0
    %v1739 = vpop.f32.mrf.mxu0
    %1740 = vdwg.mxu0
    %1741 = vmatprep.subr.bf16.mxu0 %v1206
    %1742 = vmatpush1.bf16.msra.mxu0 %v1205
    %1743 = vmatprep.subr.bf16.mxu0 %v1198
    %1744 = vmatpush1.bf16.msra.mxu0 %v1197
    %1745 = vmatprep.subr.bf16.mxu0 %v1190
    %1746 = vmatpush1.bf16.msra.mxu0 %v1189
    %1747 = vmatprep.subr.bf16.mxu0 %v1182
    %1748 = vmatpush1.bf16.msra.mxu0 %v1181
    %1749 = vmatprep.subr.bf16.mxu0 %v1174
    %1750 = vmatpush1.bf16.msra.mxu0 %v1173
    %1751 = vmatprep.subr.bf16.mxu0 %v1166
    %1752 = vmatpush1.bf16.msra.mxu0 %v1165
    %1753 = vmatprep.subr.bf16.mxu0 %v1158
    %1754 = vmatpush1.bf16.msra.mxu0 %v1157
    %1755 = vmatprep.subr.bf16.mxu0 %v1150
    %1756 = vmatpush1.bf16.msra.mxu0 %v1149
    %1757 = vmatprep.subr.bf16.mxu0 %v1270
    %1758 = vmatpush2.bf16.msra.mxu0 %v1269
    %1759 = vmatprep.subr.bf16.mxu0 %v1262
    %1760 = vmatpush2.bf16.msra.mxu0 %v1261
    %1761 = vmatprep.subr.bf16.mxu0 %v1254
    %1762 = vmatpush2.bf16.msra.mxu0 %v1253
    %1763 = vmatprep.subr.bf16.mxu0 %v1246
    %1764 = vmatpush2.bf16.msra.mxu0 %v1245
    %1765 = vmatprep.subr.bf16.mxu0 %v1238
    %1766 = vmatpush2.bf16.msra.mxu0 %v1237
    %1767 = vmatprep.subr.bf16.mxu0 %v1230
    %1768 = vmatpush2.bf16.msra.mxu0 %v1229
    %1769 = vmatprep.subr.bf16.mxu0 %v1222
    %1770 = vmatpush2.bf16.msra.mxu0 %v1221
    %1771 = vmatprep.subr.bf16.mxu0 %v1214
    %1772 = vmatpush2.bf16.msra.mxu0 %v1213
    %1773 = vmatprep.mubr.bf16.mxu0 %v78
    %1774 = vmatmul.mubr.bf16.gmra.mxu0 %v77
    %v1775 = vpop.f32.mrf.mxu0
    %v1776 = vadd.f32 %v350, %v1775
    %v1777 = vpop.f32.mrf.mxu0
    %v1778 = vadd.f32 %v354, %v1777
    %v1779 = vpop.f32.mrf.mxu0
    %v1780 = vpop.f32.mrf.mxu0
    %1781 = vdwg.mxu0
    %1782 = vmatprep.subr.bf16.mxu0 %v1334
    %1783 = vmatpush1.bf16.msra.mxu0 %v1333
    %1784 = vmatprep.subr.bf16.mxu0 %v1326
    %1785 = vmatpush1.bf16.msra.mxu0 %v1325
    %1786 = vmatprep.subr.bf16.mxu0 %v1318
    %1787 = vmatpush1.bf16.msra.mxu0 %v1317
    %1788 = vmatprep.subr.bf16.mxu0 %v1310
    %1789 = vmatpush1.bf16.msra.mxu0 %v1309
    %1790 = vmatprep.subr.bf16.mxu0 %v1302
    %1791 = vmatpush1.bf16.msra.mxu0 %v1301
    %1792 = vmatprep.subr.bf16.mxu0 %v1294
    %1793 = vmatpush1.bf16.msra.mxu0 %v1293
    %1794 = vmatprep.subr.bf16.mxu0 %v1286
    %1795 = vmatpush1.bf16.msra.mxu0 %v1285
    %1796 = vmatprep.subr.bf16.mxu0 %v1278
    %1797 = vmatpush1.bf16.msra.mxu0 %v1277
    %1798 = vmatprep.subr.bf16.mxu0 %v1398
    %1799 = vmatpush2.bf16.msra.mxu0 %v1397
    %1800 = vmatprep.subr.bf16.mxu0 %v1390
    %1801 = vmatpush2.bf16.msra.mxu0 %v1389
    %1802 = vmatprep.subr.bf16.mxu0 %v1382
    %1803 = vmatpush2.bf16.msra.mxu0 %v1381
    %1804 = vmatprep.subr.bf16.mxu0 %v1374
    %1805 = vmatpush2.bf16.msra.mxu0 %v1373
    %1806 = vmatprep.subr.bf16.mxu0 %v1366
    %1807 = vmatpush2.bf16.msra.mxu0 %v1365
    %1808 = vmatprep.subr.bf16.mxu0 %v1358
    %1809 = vmatpush2.bf16.msra.mxu0 %v1357
    %1810 = vmatprep.subr.bf16.mxu0 %v1350
    %1811 = vmatpush2.bf16.msra.mxu0 %v1349
    %1812 = vmatprep.subr.bf16.mxu0 %v1342
    %1813 = vmatpush2.bf16.msra.mxu0 %v1341
    %1814 = vmatprep.mubr.bf16.mxu0 %v80
    %1815 = vmatmul.mubr.bf16.gmra.mxu0 %v79
    %v1816 = vpop.f32.mrf.mxu0
    %v1817 = vadd.f32 %v1776, %v1816
    %v1818 = vpop.f32.mrf.mxu0
    %v1819 = vadd.f32 %v1778, %v1818
    %v1820 = vpop.f32.mrf.mxu0
    %v1821 = vpop.f32.mrf.mxu0
    %1822 = vdwg.mxu0
    %1823 = vmatprep.subr.bf16.mxu0 %v1208
    %1824 = vmatpush1.bf16.msra.mxu0 %v1207
    %1825 = vmatprep.subr.bf16.mxu0 %v1200
    %1826 = vmatpush1.bf16.msra.mxu0 %v1199
    %1827 = vmatprep.subr.bf16.mxu0 %v1192
    %1828 = vmatpush1.bf16.msra.mxu0 %v1191
    %1829 = vmatprep.subr.bf16.mxu0 %v1184
    %1830 = vmatpush1.bf16.msra.mxu0 %v1183
    %1831 = vmatprep.subr.bf16.mxu0 %v1176
    %1832 = vmatpush1.bf16.msra.mxu0 %v1175
    %1833 = vmatprep.subr.bf16.mxu0 %v1168
    %1834 = vmatpush1.bf16.msra.mxu0 %v1167
    %1835 = vmatprep.subr.bf16.mxu0 %v1160
    %1836 = vmatpush1.bf16.msra.mxu0 %v1159
    %1837 = vmatprep.subr.bf16.mxu0 %v1152
    %1838 = vmatpush1.bf16.msra.mxu0 %v1151
    %1839 = vmatprep.subr.bf16.mxu0 %v1272
    %1840 = vmatpush2.bf16.msra.mxu0 %v1271
    %1841 = vmatprep.subr.bf16.mxu0 %v1264
    %1842 = vmatpush2.bf16.msra.mxu0 %v1263
    %1843 = vmatprep.subr.bf16.mxu0 %v1256
    %1844 = vmatpush2.bf16.msra.mxu0 %v1255
    %1845 = vmatprep.subr.bf16.mxu0 %v1248
    %1846 = vmatpush2.bf16.msra.mxu0 %v1247
    %1847 = vmatprep.subr.bf16.mxu0 %v1240
    %1848 = vmatpush2.bf16.msra.mxu0 %v1239
    %1849 = vmatprep.subr.bf16.mxu0 %v1232
    %1850 = vmatpush2.bf16.msra.mxu0 %v1231
    %1851 = vmatprep.subr.bf16.mxu0 %v1224
    %1852 = vmatpush2.bf16.msra.mxu0 %v1223
    %1853 = vmatprep.subr.bf16.mxu0 %v1216
    %1854 = vmatpush2.bf16.msra.mxu0 %v1215
    %1855 = vmatprep.mubr.bf16.mxu0 %v78
    %1856 = vmatmul.mubr.bf16.gmra.mxu0 %v77
    %v1857 = vpop.f32.mrf.mxu0
    %v1858 = vadd.f32 %v358, %v1857
    %v1859 = vpop.f32.mrf.mxu0
    %v1860 = vadd.f32 %v362, %v1859
    %v1861 = vpop.f32.mrf.mxu0
    %v1862 = vpop.f32.mrf.mxu0
    %1863 = vdwg.mxu0
    %1864 = vmatprep.subr.bf16.mxu0 %v1336
    %1865 = vmatpush1.bf16.msra.mxu0 %v1335
    %1866 = vmatprep.subr.bf16.mxu0 %v1328
    %1867 = vmatpush1.bf16.msra.mxu0 %v1327
    %1868 = vmatprep.subr.bf16.mxu0 %v1320
    %1869 = vmatpush1.bf16.msra.mxu0 %v1319
    %1870 = vmatprep.subr.bf16.mxu0 %v1312
    %1871 = vmatpush1.bf16.msra.mxu0 %v1311
    %1872 = vmatprep.subr.bf16.mxu0 %v1304
    %1873 = vmatpush1.bf16.msra.mxu0 %v1303
    %1874 = vmatprep.subr.bf16.mxu0 %v1296
    %1875 = vmatpush1.bf16.msra.mxu0 %v1295
    %1876 = vmatprep.subr.bf16.mxu0 %v1288
    %1877 = vmatpush1.bf16.msra.mxu0 %v1287
    %1878 = vmatprep.subr.bf16.mxu0 %v1280
    %1879 = vmatpush1.bf16.msra.mxu0 %v1279
    %1880 = vmatprep.subr.bf16.mxu0 %v1400
    %1881 = vmatpush2.bf16.msra.mxu0 %v1399
    %1882 = vmatprep.subr.bf16.mxu0 %v1392
    %1883 = vmatpush2.bf16.msra.mxu0 %v1391
    %1884 = vmatprep.subr.bf16.mxu0 %v1384
    %1885 = vmatpush2.bf16.msra.mxu0 %v1383
    %1886 = vmatprep.subr.bf16.mxu0 %v1376
    %1887 = vmatpush2.bf16.msra.mxu0 %v1375
    %1888 = vmatprep.subr.bf16.mxu0 %v1368
    %1889 = vmatpush2.bf16.msra.mxu0 %v1367
    %1890 = vmatprep.subr.bf16.mxu0 %v1360
    %1891 = vmatpush2.bf16.msra.mxu0 %v1359
    %1892 = vmatprep.subr.bf16.mxu0 %v1352
    %1893 = vmatpush2.bf16.msra.mxu0 %v1351
    %1894 = vmatprep.subr.bf16.mxu0 %v1344
    %1895 = vmatpush2.bf16.msra.mxu0 %v1343
    %1896 = vmatprep.mubr.bf16.mxu0 %v80
    %1897 = vmatmul.mubr.bf16.gmra.mxu0 %v79
    %v1898 = vpop.f32.mrf.mxu0
    %v1899 = vadd.f32 %v1858, %v1898
    %v1900 = vpop.f32.mrf.mxu0
    %v1901 = vadd.f32 %v1860, %v1900
    %v1902 = vpop.f32.mrf.mxu0
    %v1903 = vpop.f32.mrf.mxu0
    %1904 = vdwg.mxu0
    %1905 = vmatprep.subr.bf16.mxu0 %v1210
    %1906 = vmatpush1.bf16.msra.mxu0 %v1209
    %1907 = vmatprep.subr.bf16.mxu0 %v1202
    %1908 = vmatpush1.bf16.msra.mxu0 %v1201
    %1909 = vmatprep.subr.bf16.mxu0 %v1194
    %1910 = vmatpush1.bf16.msra.mxu0 %v1193
    %1911 = vmatprep.subr.bf16.mxu0 %v1186
    %1912 = vmatpush1.bf16.msra.mxu0 %v1185
    %1913 = vmatprep.subr.bf16.mxu0 %v1178
    %1914 = vmatpush1.bf16.msra.mxu0 %v1177
    %1915 = vmatprep.subr.bf16.mxu0 %v1170
    %1916 = vmatpush1.bf16.msra.mxu0 %v1169
    %1917 = vmatprep.subr.bf16.mxu0 %v1162
    %1918 = vmatpush1.bf16.msra.mxu0 %v1161
    %1919 = vmatprep.subr.bf16.mxu0 %v1154
    %1920 = vmatpush1.bf16.msra.mxu0 %v1153
    %1921 = vmatprep.subr.bf16.mxu0 %v1274
    %1922 = vmatpush2.bf16.msra.mxu0 %v1273
    %1923 = vmatprep.subr.bf16.mxu0 %v1266
    %1924 = vmatpush2.bf16.msra.mxu0 %v1265
    %1925 = vmatprep.subr.bf16.mxu0 %v1258
    %1926 = vmatpush2.bf16.msra.mxu0 %v1257
    %1927 = vmatprep.subr.bf16.mxu0 %v1250
    %1928 = vmatpush2.bf16.msra.mxu0 %v1249
    %1929 = vmatprep.subr.bf16.mxu0 %v1242
    %1930 = vmatpush2.bf16.msra.mxu0 %v1241
    %1931 = vmatprep.subr.bf16.mxu0 %v1234
    %1932 = vmatpush2.bf16.msra.mxu0 %v1233
    %1933 = vmatprep.subr.bf16.mxu0 %v1226
    %1934 = vmatpush2.bf16.msra.mxu0 %v1225
    %1935 = vmatprep.subr.bf16.mxu0 %v1218
    %1936 = vmatpush2.bf16.msra.mxu0 %v1217
    %1937 = vmatprep.mubr.bf16.mxu0 %v78
    %1938 = vmatmul.mubr.bf16.gmra.mxu0 %v77
    %v1939 = vpop.f32.mrf.mxu0
    %v1940 = vadd.f32 %v366, %v1939
    %v1941 = vpop.f32.mrf.mxu0
    %v1942 = vadd.f32 %v370, %v1941
    %v1943 = vpop.f32.mrf.mxu0
    %v1944 = vpop.f32.mrf.mxu0
    %1945 = vdwg.mxu0
    %1946 = vmatprep.subr.bf16.mxu0 %v1338
    %1947 = vmatpush1.bf16.msra.mxu0 %v1337
    %1948 = vmatprep.subr.bf16.mxu0 %v1330
    %1949 = vmatpush1.bf16.msra.mxu0 %v1329
    %1950 = vmatprep.subr.bf16.mxu0 %v1322
    %1951 = vmatpush1.bf16.msra.mxu0 %v1321
    %1952 = vmatprep.subr.bf16.mxu0 %v1314
    %1953 = vmatpush1.bf16.msra.mxu0 %v1313
    %1954 = vmatprep.subr.bf16.mxu0 %v1306
    %1955 = vmatpush1.bf16.msra.mxu0 %v1305
    %1956 = vmatprep.subr.bf16.mxu0 %v1298
    %1957 = vmatpush1.bf16.msra.mxu0 %v1297
    %1958 = vmatprep.subr.bf16.mxu0 %v1290
    %1959 = vmatpush1.bf16.msra.mxu0 %v1289
    %1960 = vmatprep.subr.bf16.mxu0 %v1282
    %1961 = vmatpush1.bf16.msra.mxu0 %v1281
    %1962 = vmatprep.subr.bf16.mxu0 %v1402
    %1963 = vmatpush2.bf16.msra.mxu0 %v1401
    %1964 = vmatprep.subr.bf16.mxu0 %v1394
    %1965 = vmatpush2.bf16.msra.mxu0 %v1393
    %1966 = vmatprep.subr.bf16.mxu0 %v1386
    %1967 = vmatpush2.bf16.msra.mxu0 %v1385
    %1968 = vmatprep.subr.bf16.mxu0 %v1378
    %1969 = vmatpush2.bf16.msra.mxu0 %v1377
    %1970 = vmatprep.subr.bf16.mxu0 %v1370
    %1971 = vmatpush2.bf16.msra.mxu0 %v1369
    %1972 = vmatprep.subr.bf16.mxu0 %v1362
    %1973 = vmatpush2.bf16.msra.mxu0 %v1361
    %1974 = vmatprep.subr.bf16.mxu0 %v1354
    %1975 = vmatpush2.bf16.msra.mxu0 %v1353
    %1976 = vmatprep.subr.bf16.mxu0 %v1346
    %1977 = vmatpush2.bf16.msra.mxu0 %v1345
    %1978 = vmatprep.mubr.bf16.mxu0 %v80
    %1979 = vmatmul.mubr.bf16.gmra.mxu0 %v79
    %v1980 = vpop.f32.mrf.mxu0
    %v1981 = vadd.f32 %v1940, %v1980
    %v1982 = vpop.f32.mrf.mxu0
    %v1983 = vadd.f32 %v1942, %v1982
    %v1984 = vpop.f32.mrf.mxu0
    %v1985 = vpop.f32.mrf.mxu0
    %1986 = vdwg.mxu0
    %v1987 = vmax.f32 %v1735, 0.0
    %v1988 = vmax.f32 %v1737, 0.0
    %v1989 = vmax.f32 %v1817, 0.0
    %v1990 = vmax.f32 %v1819, 0.0
    %v1991 = vmax.f32 %v1899, 0.0
    %v1992 = vmax.f32 %v1901, 0.0
    %v1993 = vmax.f32 %v1981, 0.0
    %v1994 = vmax.f32 %v1983, 0.0
    %v1995 = vpack.c.bf16 %v1987, %v1987
    %v1996 = vpack.c.bf16 %v1988, %v1988
    %v1997 = vpack.c.bf16 %v1989, %v1989
    %v1998 = vpack.c.bf16 %v1990, %v1990
    %v1999 = vpack.c.bf16 %v1991, %v1991
    %v2000 = vpack.c.bf16 %v1992, %v1992
    %v2001 = vpack.c.bf16 %v1993, %v1993
    %v2002 = vpack.c.bf16 %v1994, %v1994
    %v2003 = vld [vmem:[#allocation8] sm:$0xf]
    %v2004 = vld [vmem:[#allocation8 + $0x4] sm:$0xf]
    %v2005 = vld [vmem:[#allocation8 + $0x8] sm:$0xf]
    %v2006 = vld [vmem:[#allocation8 + $0xc] sm:$0xf]
    %v2007 = vld [vmem:[#allocation8 + $0x10] sm:$0xf]
    %v2008 = vld [vmem:[#allocation8 + $0x14] sm:$0xf]
    %v2009 = vld [vmem:[#allocation8 + $0x18] sm:$0xf]
    %v2010 = vld [vmem:[#allocation8 + $0x1c] sm:$0xf]
    %v2011 = vld [vmem:[#allocation8 + $0x20] sm:$0xf]
    %v2012 = vld [vmem:[#allocation8 + $0x24] sm:$0xf]
    %v2013 = vld [vmem:[#allocation8 + $0x28] sm:$0xf]
    %v2014 = vld [vmem:[#allocation8 + $0x2c] sm:$0xf]
    %v2015 = vld [vmem:[#allocation8 + $0x30] sm:$0xf]
    %v2016 = vld [vmem:[#allocation8 + $0x34] sm:$0xf]
    %v2017 = vld [vmem:[#allocation8 + $0x38] sm:$0xf]
    %v2018 = vld [vmem:[#allocation8 + $0x3c] sm:$0xf]
    %v2019 = vld [vmem:[#allocation8 + $0x40] sm:$0xf]
    %v2020 = vld [vmem:[#allocation8 + $0x44] sm:$0xf]
    %v2021 = vld [vmem:[#allocation8 + $0x48] sm:$0xf]
    %v2022 = vld [vmem:[#allocation8 + $0x4c] sm:$0xf]
    %v2023 = vld [vmem:[#allocation8 + $0x50] sm:$0xf]
    %v2024 = vld [vmem:[#allocation8 + $0x54] sm:$0xf]
    %v2025 = vld [vmem:[#allocation8 + $0x58] sm:$0xf]
    %v2026 = vld [vmem:[#allocation8 + $0x5c] sm:$0xf]
    %v2027 = vld [vmem:[#allocation8 + $0x60] sm:$0xf]
    %v2028 = vld [vmem:[#allocation8 + $0x64] sm:$0xf]
    %v2029 = vld [vmem:[#allocation8 + $0x68] sm:$0xf]
    %v2030 = vld [vmem:[#allocation8 + $0x6c] sm:$0xf]
    %v2031 = vld [vmem:[#allocation8 + $0x70] sm:$0xf]
    %v2032 = vld [vmem:[#allocation8 + $0x74] sm:$0xf]
    %v2033 = vld [vmem:[#allocation8 + $0x78] sm:$0xf]
    %v2034 = vld [vmem:[#allocation8 + $0x7c] sm:$0xf]
    %v2035 = vld [vmem:[#allocation8 + $0x80] sm:$0xf]
    %v2036 = vld [vmem:[#allocation8 + $0x84] sm:$0xf]
    %v2037 = vld [vmem:[#allocation8 + $0x88] sm:$0xf]
    %v2038 = vld [vmem:[#allocation8 + $0x8c] sm:$0xf]
    %v2039 = vld [vmem:[#allocation8 + $0x90] sm:$0xf]
    %v2040 = vld [vmem:[#allocation8 + $0x94] sm:$0xf]
    %v2041 = vld [vmem:[#allocation8 + $0x98] sm:$0xf]
    %v2042 = vld [vmem:[#allocation8 + $0x9c] sm:$0xf]
    %v2043 = vld [vmem:[#allocation8 + $0xa0] sm:$0xf]
    %v2044 = vld [vmem:[#allocation8 + $0xa4] sm:$0xf]
    %v2045 = vld [vmem:[#allocation8 + $0xa8] sm:$0xf]
    %v2046 = vld [vmem:[#allocation8 + $0xac] sm:$0xf]
    %v2047 = vld [vmem:[#allocation8 + $0xb0] sm:$0xf]
    %v2048 = vld [vmem:[#allocation8 + $0xb4] sm:$0xf]
    %v2049 = vld [vmem:[#allocation8 + $0xb8] sm:$0xf]
    %v2050 = vld [vmem:[#allocation8 + $0xbc] sm:$0xf]
    %v2051 = vld [vmem:[#allocation8 + $0xc0] sm:$0xf]
    %v2052 = vld [vmem:[#allocation8 + $0xc4] sm:$0xf]
    %v2053 = vld [vmem:[#allocation8 + $0xc8] sm:$0xf]
    %v2054 = vld [vmem:[#allocation8 + $0xcc] sm:$0xf]
    %v2055 = vld [vmem:[#allocation8 + $0xd0] sm:$0xf]
    %v2056 = vld [vmem:[#allocation8 + $0xd4] sm:$0xf]
    %v2057 = vld [vmem:[#allocation8 + $0xd8] sm:$0xf]
    %v2058 = vld [vmem:[#allocation8 + $0xdc] sm:$0xf]
    %v2059 = vld [vmem:[#allocation8 + $0xe0] sm:$0xf]
    %v2060 = vld [vmem:[#allocation8 + $0xe4] sm:$0xf]
    %v2061 = vld [vmem:[#allocation8 + $0xe8] sm:$0xf]
    %v2062 = vld [vmem:[#allocation8 + $0xec] sm:$0xf]
    %v2063 = vld [vmem:[#allocation8 + $0xf0] sm:$0xf]
    %v2064 = vld [vmem:[#allocation8 + $0xf4] sm:$0xf]
    %v2065 = vld [vmem:[#allocation8 + $0xf8] sm:$0xf]
    %v2066 = vld [vmem:[#allocation8 + $0xfc] sm:$0xf]
    %v2067 = vld [vmem:[#allocation8 + $0x100] sm:$0xf]
    %v2068 = vld [vmem:[#allocation8 + $0x104] sm:$0xf]
    %v2069 = vld [vmem:[#allocation8 + $0x108] sm:$0xf]
    %v2070 = vld [vmem:[#allocation8 + $0x10c] sm:$0xf]
    %v2071 = vld [vmem:[#allocation8 + $0x110] sm:$0xf]
    %v2072 = vld [vmem:[#allocation8 + $0x114] sm:$0xf]
    %v2073 = vld [vmem:[#allocation8 + $0x118] sm:$0xf]
    %v2074 = vld [vmem:[#allocation8 + $0x11c] sm:$0xf]
    %v2075 = vld [vmem:[#allocation8 + $0x120] sm:$0xf]
    %v2076 = vld [vmem:[#allocation8 + $0x124] sm:$0xf]
    %v2077 = vld [vmem:[#allocation8 + $0x128] sm:$0xf]
    %v2078 = vld [vmem:[#allocation8 + $0x12c] sm:$0xf]
    %v2079 = vld [vmem:[#allocation8 + $0x130] sm:$0xf]
    %v2080 = vld [vmem:[#allocation8 + $0x134] sm:$0xf]
    %v2081 = vld [vmem:[#allocation8 + $0x138] sm:$0xf]
    %v2082 = vld [vmem:[#allocation8 + $0x13c] sm:$0xf]
    %v2083 = vld [vmem:[#allocation8 + $0x140] sm:$0xf]
    %v2084 = vld [vmem:[#allocation8 + $0x144] sm:$0xf]
    %v2085 = vld [vmem:[#allocation8 + $0x148] sm:$0xf]
    %v2086 = vld [vmem:[#allocation8 + $0x14c] sm:$0xf]
    %v2087 = vld [vmem:[#allocation8 + $0x150] sm:$0xf]
    %v2088 = vld [vmem:[#allocation8 + $0x154] sm:$0xf]
    %v2089 = vld [vmem:[#allocation8 + $0x158] sm:$0xf]
    %v2090 = vld [vmem:[#allocation8 + $0x15c] sm:$0xf]
    %v2091 = vld [vmem:[#allocation8 + $0x160] sm:$0xf]
    %v2092 = vld [vmem:[#allocation8 + $0x164] sm:$0xf]
    %v2093 = vld [vmem:[#allocation8 + $0x168] sm:$0xf]
    %v2094 = vld [vmem:[#allocation8 + $0x16c] sm:$0xf]
    %v2095 = vld [vmem:[#allocation8 + $0x170] sm:$0xf]
    %v2096 = vld [vmem:[#allocation8 + $0x174] sm:$0xf]
    %v2097 = vld [vmem:[#allocation8 + $0x178] sm:$0xf]
    %v2098 = vld [vmem:[#allocation8 + $0x17c] sm:$0xf]
    %v2099 = vld [vmem:[#allocation8 + $0x180] sm:$0xf]
    %v2100 = vld [vmem:[#allocation8 + $0x184] sm:$0xf]
    %v2101 = vld [vmem:[#allocation8 + $0x188] sm:$0xf]
    %v2102 = vld [vmem:[#allocation8 + $0x18c] sm:$0xf]
    %v2103 = vld [vmem:[#allocation8 + $0x190] sm:$0xf]
    %v2104 = vld [vmem:[#allocation8 + $0x194] sm:$0xf]
    %v2105 = vld [vmem:[#allocation8 + $0x198] sm:$0xf]
    %v2106 = vld [vmem:[#allocation8 + $0x19c] sm:$0xf]
    %v2107 = vld [vmem:[#allocation8 + $0x1a0] sm:$0xf]
    %v2108 = vld [vmem:[#allocation8 + $0x1a4] sm:$0xf]
    %v2109 = vld [vmem:[#allocation8 + $0x1a8] sm:$0xf]
    %v2110 = vld [vmem:[#allocation8 + $0x1ac] sm:$0xf]
    %v2111 = vld [vmem:[#allocation8 + $0x1b0] sm:$0xf]
    %v2112 = vld [vmem:[#allocation8 + $0x1b4] sm:$0xf]
    %v2113 = vld [vmem:[#allocation8 + $0x1b8] sm:$0xf]
    %v2114 = vld [vmem:[#allocation8 + $0x1bc] sm:$0xf]
    %v2115 = vld [vmem:[#allocation8 + $0x1c0] sm:$0xf]
    %v2116 = vld [vmem:[#allocation8 + $0x1c4] sm:$0xf]
    %v2117 = vld [vmem:[#allocation8 + $0x1c8] sm:$0xf]
    %v2118 = vld [vmem:[#allocation8 + $0x1cc] sm:$0xf]
    %v2119 = vld [vmem:[#allocation8 + $0x1d0] sm:$0xf]
    %v2120 = vld [vmem:[#allocation8 + $0x1d4] sm:$0xf]
    %v2121 = vld [vmem:[#allocation8 + $0x1d8] sm:$0xf]
    %v2122 = vld [vmem:[#allocation8 + $0x1dc] sm:$0xf]
    %v2123 = vld [vmem:[#allocation8 + $0x1e0] sm:$0xf]
    %v2124 = vld [vmem:[#allocation8 + $0x1e4] sm:$0xf]
    %v2125 = vld [vmem:[#allocation8 + $0x1e8] sm:$0xf]
    %v2126 = vld [vmem:[#allocation8 + $0x1ec] sm:$0xf]
    %v2127 = vld [vmem:[#allocation8 + $0x1f0] sm:$0xf]
    %v2128 = vld [vmem:[#allocation8 + $0x1f4] sm:$0xf]
    %v2129 = vld [vmem:[#allocation8 + $0x1f8] sm:$0xf]
    %v2130 = vld [vmem:[#allocation8 + $0x1fc] sm:$0xf]
    %v2131 = vld [vmem:[%s4] sm:$0x1]
    %v2133 = vlaneseq
    %v2134 = vshrl.u32 %v2133, 7
    %v2135 = vsub.s32 0, %v2134
    %v2136 = vrot.slane %v2131, %v2135
    %v2266 = vunpack.c.l.b16 %v2003
    %v2267 = vunpack.c.l.b16 %v2004
    %v2268 = vunpack.c.l.b16 %v2005
    %v2269 = vunpack.c.l.b16 %v2006
    %v2270 = vunpack.c.l.b16 %v2007
    %v2271 = vunpack.c.l.b16 %v2008
    %v2272 = vunpack.c.l.b16 %v2009
    %v2273 = vunpack.c.l.b16 %v2010
    %v2274 = vunpack.c.l.b16 %v2011
    %v2275 = vunpack.c.l.b16 %v2012
    %v2276 = vunpack.c.l.b16 %v2013
    %v2277 = vunpack.c.l.b16 %v2014
    %v2278 = vunpack.c.l.b16 %v2015
    %v2279 = vunpack.c.l.b16 %v2016
    %v2280 = vunpack.c.l.b16 %v2017
    %v2281 = vunpack.c.l.b16 %v2018
    %v2282 = vunpack.c.l.b16 %v2019
    %v2283 = vunpack.c.l.b16 %v2020
    %v2284 = vunpack.c.l.b16 %v2021
    %v2285 = vunpack.c.l.b16 %v2022
    %v2286 = vunpack.c.l.b16 %v2023
    %v2287 = vunpack.c.l.b16 %v2024
    %v2288 = vunpack.c.l.b16 %v2025
    %v2289 = vunpack.c.l.b16 %v2026
    %v2290 = vunpack.c.l.b16 %v2027
    %v2291 = vunpack.c.l.b16 %v2028
    %v2292 = vunpack.c.l.b16 %v2029
    %v2293 = vunpack.c.l.b16 %v2030
    %v2294 = vunpack.c.l.b16 %v2031
    %v2295 = vunpack.c.l.b16 %v2032
    %v2296 = vunpack.c.l.b16 %v2033
    %v2297 = vunpack.c.l.b16 %v2034
    %v2298 = vunpack.c.l.b16 %v2035
    %v2299 = vunpack.c.l.b16 %v2036
    %v2300 = vunpack.c.l.b16 %v2037
    %v2301 = vunpack.c.l.b16 %v2038
    %v2302 = vunpack.c.l.b16 %v2039
    %v2303 = vunpack.c.l.b16 %v2040
    %v2304 = vunpack.c.l.b16 %v2041
    %v2305 = vunpack.c.l.b16 %v2042
    %v2306 = vunpack.c.l.b16 %v2043
    %v2307 = vunpack.c.l.b16 %v2044
    %v2308 = vunpack.c.l.b16 %v2045
    %v2309 = vunpack.c.l.b16 %v2046
    %v2310 = vunpack.c.l.b16 %v2047
    %v2311 = vunpack.c.l.b16 %v2048
    %v2312 = vunpack.c.l.b16 %v2049
    %v2313 = vunpack.c.l.b16 %v2050
    %v2314 = vunpack.c.l.b16 %v2051
    %v2315 = vunpack.c.l.b16 %v2052
    %v2316 = vunpack.c.l.b16 %v2053
    %v2317 = vunpack.c.l.b16 %v2054
    %v2318 = vunpack.c.l.b16 %v2055
    %v2319 = vunpack.c.l.b16 %v2056
    %v2320 = vunpack.c.l.b16 %v2057
    %v2321 = vunpack.c.l.b16 %v2058
    %v2322 = vunpack.c.l.b16 %v2059
    %v2323 = vunpack.c.l.b16 %v2060
    %v2324 = vunpack.c.l.b16 %v2061
    %v2325 = vunpack.c.l.b16 %v2062
    %v2326 = vunpack.c.l.b16 %v2063
    %v2327 = vunpack.c.l.b16 %v2064
    %v2328 = vunpack.c.l.b16 %v2065
    %v2329 = vunpack.c.l.b16 %v2066
    %v2330 = vunpack.c.l.b16 %v2067
    %v2331 = vunpack.c.l.b16 %v2068
    %v2332 = vunpack.c.l.b16 %v2069
    %v2333 = vunpack.c.l.b16 %v2070
    %v2334 = vunpack.c.l.b16 %v2071
    %v2335 = vunpack.c.l.b16 %v2072
    %v2336 = vunpack.c.l.b16 %v2073
    %v2337 = vunpack.c.l.b16 %v2074
    %v2338 = vunpack.c.l.b16 %v2075
    %v2339 = vunpack.c.l.b16 %v2076
    %v2340 = vunpack.c.l.b16 %v2077
    %v2341 = vunpack.c.l.b16 %v2078
    %v2342 = vunpack.c.l.b16 %v2079
    %v2343 = vunpack.c.l.b16 %v2080
    %v2344 = vunpack.c.l.b16 %v2081
    %v2345 = vunpack.c.l.b16 %v2082
    %v2346 = vunpack.c.l.b16 %v2083
    %v2347 = vunpack.c.l.b16 %v2084
    %v2348 = vunpack.c.l.b16 %v2085
    %v2349 = vunpack.c.l.b16 %v2086
    %v2350 = vunpack.c.l.b16 %v2087
    %v2351 = vunpack.c.l.b16 %v2088
    %v2352 = vunpack.c.l.b16 %v2089
    %v2353 = vunpack.c.l.b16 %v2090
    %v2354 = vunpack.c.l.b16 %v2091
    %v2355 = vunpack.c.l.b16 %v2092
    %v2356 = vunpack.c.l.b16 %v2093
    %v2357 = vunpack.c.l.b16 %v2094
    %v2358 = vunpack.c.l.b16 %v2095
    %v2359 = vunpack.c.l.b16 %v2096
    %v2360 = vunpack.c.l.b16 %v2097
    %v2361 = vunpack.c.l.b16 %v2098
    %v2362 = vunpack.c.l.b16 %v2099
    %v2363 = vunpack.c.l.b16 %v2100
    %v2364 = vunpack.c.l.b16 %v2101
    %v2365 = vunpack.c.l.b16 %v2102
    %v2366 = vunpack.c.l.b16 %v2103
    %v2367 = vunpack.c.l.b16 %v2104
    %v2368 = vunpack.c.l.b16 %v2105
    %v2369 = vunpack.c.l.b16 %v2106
    %v2370 = vunpack.c.l.b16 %v2107
    %v2371 = vunpack.c.l.b16 %v2108
    %v2372 = vunpack.c.l.b16 %v2109
    %v2373 = vunpack.c.l.b16 %v2110
    %v2374 = vunpack.c.l.b16 %v2111
    %v2375 = vunpack.c.l.b16 %v2112
    %v2376 = vunpack.c.l.b16 %v2113
    %v2377 = vunpack.c.l.b16 %v2114
    %v2378 = vunpack.c.l.b16 %v2115
    %v2379 = vunpack.c.l.b16 %v2116
    %v2380 = vunpack.c.l.b16 %v2117
    %v2381 = vunpack.c.l.b16 %v2118
    %v2382 = vunpack.c.l.b16 %v2119
    %v2383 = vunpack.c.l.b16 %v2120
    %v2384 = vunpack.c.l.b16 %v2121
    %v2385 = vunpack.c.l.b16 %v2122
    %v2386 = vunpack.c.l.b16 %v2123
    %v2387 = vunpack.c.l.b16 %v2124
    %v2388 = vunpack.c.l.b16 %v2125
    %v2389 = vunpack.c.l.b16 %v2126
    %v2390 = vunpack.c.l.b16 %v2127
    %v2391 = vunpack.c.l.b16 %v2128
    %v2392 = vunpack.c.l.b16 %v2129
    %v2393 = vunpack.c.l.b16 %v2130
    %v2394 = vpack.c.b16 %v2267, %v2266
    %v2395 = vpack.c.b16 %v2269, %v2268
    %v2396 = vpack.c.b16 %v2271, %v2270
    %v2397 = vpack.c.b16 %v2273, %v2272
    %v2398 = vpack.c.b16 %v2275, %v2274
    %v2399 = vpack.c.b16 %v2277, %v2276
    %v2400 = vpack.c.b16 %v2279, %v2278
    %v2401 = vpack.c.b16 %v2281, %v2280
    %v2402 = vpack.c.b16 %v2283, %v2282
    %v2403 = vpack.c.b16 %v2285, %v2284
    %v2404 = vpack.c.b16 %v2287, %v2286
    %v2405 = vpack.c.b16 %v2289, %v2288
    %v2406 = vpack.c.b16 %v2291, %v2290
    %v2407 = vpack.c.b16 %v2293, %v2292
    %v2408 = vpack.c.b16 %v2295, %v2294
    %v2409 = vpack.c.b16 %v2297, %v2296
    %v2410 = vpack.c.b16 %v2299, %v2298
    %v2411 = vpack.c.b16 %v2301, %v2300
    %v2412 = vpack.c.b16 %v2303, %v2302
    %v2413 = vpack.c.b16 %v2305, %v2304
    %v2414 = vpack.c.b16 %v2307, %v2306
    %v2415 = vpack.c.b16 %v2309, %v2308
    %v2416 = vpack.c.b16 %v2311, %v2310
    %v2417 = vpack.c.b16 %v2313, %v2312
    %v2418 = vpack.c.b16 %v2315, %v2314
    %v2419 = vpack.c.b16 %v2317, %v2316
    %v2420 = vpack.c.b16 %v2319, %v2318
    %v2421 = vpack.c.b16 %v2321, %v2320
    %v2422 = vpack.c.b16 %v2323, %v2322
    %v2423 = vpack.c.b16 %v2325, %v2324
    %v2424 = vpack.c.b16 %v2327, %v2326
    %v2425 = vpack.c.b16 %v2329, %v2328
    %v2426 = vpack.c.b16 %v2331, %v2330
    %v2427 = vpack.c.b16 %v2333, %v2332
    %v2428 = vpack.c.b16 %v2335, %v2334
    %v2429 = vpack.c.b16 %v2337, %v2336
    %v2430 = vpack.c.b16 %v2339, %v2338
    %v2431 = vpack.c.b16 %v2341, %v2340
    %v2432 = vpack.c.b16 %v2343, %v2342
    %v2433 = vpack.c.b16 %v2345, %v2344
    %v2434 = vpack.c.b16 %v2347, %v2346
    %v2435 = vpack.c.b16 %v2349, %v2348
    %v2436 = vpack.c.b16 %v2351, %v2350
    %v2437 = vpack.c.b16 %v2353, %v2352
    %v2438 = vpack.c.b16 %v2355, %v2354
    %v2439 = vpack.c.b16 %v2357, %v2356
    %v2440 = vpack.c.b16 %v2359, %v2358
    %v2441 = vpack.c.b16 %v2361, %v2360
    %v2442 = vpack.c.b16 %v2363, %v2362
    %v2443 = vpack.c.b16 %v2365, %v2364
    %v2444 = vpack.c.b16 %v2367, %v2366
    %v2445 = vpack.c.b16 %v2369, %v2368
    %v2446 = vpack.c.b16 %v2371, %v2370
    %v2447 = vpack.c.b16 %v2373, %v2372
    %v2448 = vpack.c.b16 %v2375, %v2374
    %v2449 = vpack.c.b16 %v2377, %v2376
    %v2450 = vpack.c.b16 %v2379, %v2378
    %v2451 = vpack.c.b16 %v2381, %v2380
    %v2452 = vpack.c.b16 %v2383, %v2382
    %v2453 = vpack.c.b16 %v2385, %v2384
    %v2454 = vpack.c.b16 %v2387, %v2386
    %v2455 = vpack.c.b16 %v2389, %v2388
    %v2456 = vpack.c.b16 %v2391, %v2390
    %v2457 = vpack.c.b16 %v2393, %v2392
    %2522 = vmatprep.subr.bf16.mxu0 0
    %2523 = vmatpush1.bf16.msra.mxu0 %v2401
    %2524 = vmatprep.subr.bf16.mxu0 0
    %2525 = vmatpush1.bf16.msra.mxu0 %v2400
    %2526 = vmatprep.subr.bf16.mxu0 0
    %2527 = vmatpush1.bf16.msra.mxu0 %v2399
    %2528 = vmatprep.subr.bf16.mxu0 0
    %2529 = vmatpush1.bf16.msra.mxu0 %v2398
    %2530 = vmatprep.subr.bf16.mxu0 0
    %2531 = vmatpush1.bf16.msra.mxu0 %v2397
    %2532 = vmatprep.subr.bf16.mxu0 0
    %2533 = vmatpush1.bf16.msra.mxu0 %v2396
    %2534 = vmatprep.subr.bf16.mxu0 0
    %2535 = vmatpush1.bf16.msra.mxu0 %v2395
    %2536 = vmatprep.subr.bf16.mxu0 0
    %2537 = vmatpush1.bf16.msra.mxu0 %v2394
    %2538 = vmatprep.subr.bf16.mxu0 0
    %2539 = vmatpush2.bf16.msra.mxu0 %v2409
    %2540 = vmatprep.subr.bf16.mxu0 0
    %2541 = vmatpush2.bf16.msra.mxu0 %v2408
    %2542 = vmatprep.subr.bf16.mxu0 0
    %2543 = vmatpush2.bf16.msra.mxu0 %v2407
    %2544 = vmatprep.subr.bf16.mxu0 0
    %2545 = vmatpush2.bf16.msra.mxu0 %v2406
    %2546 = vmatprep.subr.bf16.mxu0 0
    %2547 = vmatpush2.bf16.msra.mxu0 %v2405
    %2548 = vmatprep.subr.bf16.mxu0 0
    %2549 = vmatpush2.bf16.msra.mxu0 %v2404
    %2550 = vmatprep.subr.bf16.mxu0 0
    %2551 = vmatpush2.bf16.msra.mxu0 %v2403
    %2552 = vmatprep.subr.bf16.mxu0 0
    %2553 = vmatpush2.bf16.msra.mxu0 %v2402
    %2554 = vmatprep.mubr.bf16.mxu0 %v1996
    %2555 = vmatmul.mubr.bf16.gmra.mxu0 %v1995
    %v2556 = vpop.f32.mrf.mxu0
    %v2557 = vadd.f32 %v2136, %v2556
    %v2558 = vpop.f32.mrf.mxu0
    %v2559 = vpop.f32.mrf.mxu0
    %v2560 = vpop.f32.mrf.mxu0
    %2561 = vdwg.mxu0
    %2562 = vmatprep.subr.bf16.mxu0 0
    %2563 = vmatpush1.bf16.msra.mxu0 %v2417
    %2564 = vmatprep.subr.bf16.mxu0 0
    %2565 = vmatpush1.bf16.msra.mxu0 %v2416
    %2566 = vmatprep.subr.bf16.mxu0 0
    %2567 = vmatpush1.bf16.msra.mxu0 %v2415
    %2568 = vmatprep.subr.bf16.mxu0 0
    %2569 = vmatpush1.bf16.msra.mxu0 %v2414
    %2570 = vmatprep.subr.bf16.mxu0 0
    %2571 = vmatpush1.bf16.msra.mxu0 %v2413
    %2572 = vmatprep.subr.bf16.mxu0 0
    %2573 = vmatpush1.bf16.msra.mxu0 %v2412
    %2574 = vmatprep.subr.bf16.mxu0 0
    %2575 = vmatpush1.bf16.msra.mxu0 %v2411
    %2576 = vmatprep.subr.bf16.mxu0 0
    %2577 = vmatpush1.bf16.msra.mxu0 %v2410
    %2578 = vmatprep.subr.bf16.mxu0 0
    %2579 = vmatpush2.bf16.msra.mxu0 %v2425
    %2580 = vmatprep.subr.bf16.mxu0 0
    %2581 = vmatpush2.bf16.msra.mxu0 %v2424
    %2582 = vmatprep.subr.bf16.mxu0 0
    %2583 = vmatpush2.bf16.msra.mxu0 %v2423
    %2584 = vmatprep.subr.bf16.mxu0 0
    %2585 = vmatpush2.bf16.msra.mxu0 %v2422
    %2586 = vmatprep.subr.bf16.mxu0 0
    %2587 = vmatpush2.bf16.msra.mxu0 %v2421
    %2588 = vmatprep.subr.bf16.mxu0 0
    %2589 = vmatpush2.bf16.msra.mxu0 %v2420
    %2590 = vmatprep.subr.bf16.mxu0 0
    %2591 = vmatpush2.bf16.msra.mxu0 %v2419
    %2592 = vmatprep.subr.bf16.mxu0 0
    %2593 = vmatpush2.bf16.msra.mxu0 %v2418
    %2594 = vmatprep.mubr.bf16.mxu0 %v1998
    %2595 = vmatmul.mubr.bf16.gmra.mxu0 %v1997
    %v2596 = vpop.f32.mrf.mxu0
    %v2597 = vadd.f32 %v2557, %v2596
    %v2598 = vpop.f32.mrf.mxu0
    %v2599 = vpop.f32.mrf.mxu0
    %v2600 = vpop.f32.mrf.mxu0
    %2601 = vdwg.mxu0
    %2602 = vmatprep.subr.bf16.mxu0 0
    %2603 = vmatpush1.bf16.msra.mxu0 %v2433
    %2604 = vmatprep.subr.bf16.mxu0 0
    %2605 = vmatpush1.bf16.msra.mxu0 %v2432
    %2606 = vmatprep.subr.bf16.mxu0 0
    %2607 = vmatpush1.bf16.msra.mxu0 %v2431
    %2608 = vmatprep.subr.bf16.mxu0 0
    %2609 = vmatpush1.bf16.msra.mxu0 %v2430
    %2610 = vmatprep.subr.bf16.mxu0 0
    %2611 = vmatpush1.bf16.msra.mxu0 %v2429
    %2612 = vmatprep.subr.bf16.mxu0 0
    %2613 = vmatpush1.bf16.msra.mxu0 %v2428
    %2614 = vmatprep.subr.bf16.mxu0 0
    %2615 = vmatpush1.bf16.msra.mxu0 %v2427
    %2616 = vmatprep.subr.bf16.mxu0 0
    %2617 = vmatpush1.bf16.msra.mxu0 %v2426
    %2618 = vmatprep.subr.bf16.mxu0 0
    %2619 = vmatpush2.bf16.msra.mxu0 %v2441
    %2620 = vmatprep.subr.bf16.mxu0 0
    %2621 = vmatpush2.bf16.msra.mxu0 %v2440
    %2622 = vmatprep.subr.bf16.mxu0 0
    %2623 = vmatpush2.bf16.msra.mxu0 %v2439
    %2624 = vmatprep.subr.bf16.mxu0 0
    %2625 = vmatpush2.bf16.msra.mxu0 %v2438
    %2626 = vmatprep.subr.bf16.mxu0 0
    %2627 = vmatpush2.bf16.msra.mxu0 %v2437
    %2628 = vmatprep.subr.bf16.mxu0 0
    %2629 = vmatpush2.bf16.msra.mxu0 %v2436
    %2630 = vmatprep.subr.bf16.mxu0 0
    %2631 = vmatpush2.bf16.msra.mxu0 %v2435
    %2632 = vmatprep.subr.bf16.mxu0 0
    %2633 = vmatpush2.bf16.msra.mxu0 %v2434
    %2634 = vmatprep.mubr.bf16.mxu0 %v2000
    %2635 = vmatmul.mubr.bf16.gmra.mxu0 %v1999
    %v2636 = vpop.f32.mrf.mxu0
    %v2637 = vadd.f32 %v2597, %v2636
    %v2638 = vpop.f32.mrf.mxu0
    %v2639 = vpop.f32.mrf.mxu0
    %v2640 = vpop.f32.mrf.mxu0
    %2641 = vdwg.mxu0
    %2642 = vmatprep.subr.bf16.mxu0 0
    %2643 = vmatpush1.bf16.msra.mxu0 %v2449
    %2644 = vmatprep.subr.bf16.mxu0 0
    %2645 = vmatpush1.bf16.msra.mxu0 %v2448
    %2646 = vmatprep.subr.bf16.mxu0 0
    %2647 = vmatpush1.bf16.msra.mxu0 %v2447
    %2648 = vmatprep.subr.bf16.mxu0 0
    %2649 = vmatpush1.bf16.msra.mxu0 %v2446
    %2650 = vmatprep.subr.bf16.mxu0 0
    %2651 = vmatpush1.bf16.msra.mxu0 %v2445
    %2652 = vmatprep.subr.bf16.mxu0 0
    %2653 = vmatpush1.bf16.msra.mxu0 %v2444
    %2654 = vmatprep.subr.bf16.mxu0 0
    %2655 = vmatpush1.bf16.msra.mxu0 %v2443
    %2656 = vmatprep.subr.bf16.mxu0 0
    %2657 = vmatpush1.bf16.msra.mxu0 %v2442
    %2658 = vmatprep.subr.bf16.mxu0 0
    %2659 = vmatpush2.bf16.msra.mxu0 %v2457
    %2660 = vmatprep.subr.bf16.mxu0 0
    %2661 = vmatpush2.bf16.msra.mxu0 %v2456
    %2662 = vmatprep.subr.bf16.mxu0 0
    %2663 = vmatpush2.bf16.msra.mxu0 %v2455
    %2664 = vmatprep.subr.bf16.mxu0 0
    %2665 = vmatpush2.bf16.msra.mxu0 %v2454
    %2666 = vmatprep.subr.bf16.mxu0 0
    %2667 = vmatpush2.bf16.msra.mxu0 %v2453
    %2668 = vmatprep.subr.bf16.mxu0 0
    %2669 = vmatpush2.bf16.msra.mxu0 %v2452
    %2670 = vmatprep.subr.bf16.mxu0 0
    %2671 = vmatpush2.bf16.msra.mxu0 %v2451
    %2672 = vmatprep.subr.bf16.mxu0 0
    %2673 = vmatpush2.bf16.msra.mxu0 %v2450
    %2674 = vmatprep.mubr.bf16.mxu0 %v2002
    %2675 = vmatmul.mubr.bf16.gmra.mxu0 %v2001
    %v2676 = vpop.f32.mrf.mxu0
    %v2677 = vadd.f32 %v2637, %v2676
    %v2678 = vpop.f32.mrf.mxu0
    %v2679 = vpop.f32.mrf.mxu0
    %v2680 = vpop.f32.mrf.mxu0
    %2681 = vdwg.mxu0
    %v2682 = vpack.c.bf16 %v2677, %v2677
    %2683 = vst [vmem:[#allocation10] sm:$0xf] %v2682
    // Predicated region
    $region38: #{tpu_custom_call.1} parent=1 // pred_check
      _
    $region39: #{tpu_custom_call.1} parent=1 // pred_check_branch
      %2685 = sbr.rel (0) target = $region41
    $region40: #{tpu_custom_call.1} parent=1 // pred_region
      %s2687 = ssub.s32 64, 64
      %2688 = vsyncadd [#allocation4], %s2687
      %s2690 = sshll.u32 [#allocation10], 4
      %s2691 = int_to_ptr.vmem [resolvable:$true] %s2690
      %2693 = dma.vmem_to_hbm [thread:$0]  %s2691, 64, %s5, [#allocation4]
    $region41: #{tpu_custom_call.1} parent=1 // pred_fallthru
      _
    // Predicated region
    $region42: #{tpu_custom_call.1} parent=1 // pred_check
      _
    $region43: #{tpu_custom_call.1} parent=1 // pred_check_branch
      %2695 = sbr.rel (0) target = $region45
    $region44: #{tpu_custom_call.1} parent=1 // pred_region
      %2696 = dma.done [#allocation4], 64
    $region45: #{tpu_custom_call.1} parent=1 // pred_fallthru
      _
    %2697 = vsyncpa [#allocation3], 1
    %2698 = vsyncpa [#allocation6], 1
    %2699 = vsyncpa [#allocation9], 1
    %2700 = vsyncpa [#allocation4], 1

</llo_original>
